<compile_context>
chip_gen: v5e
topology: v5e:2x2
jax: 0.10.0
libtpu: 0.0.40
codegen_flags: <defaults>
</compile_context>

<pallas_src>
import functools

import jax
import jax.numpy as jnp
from jax import lax
from jax.experimental import pallas as pl
from jax.experimental.pallas import tpu as pltpu


def _bicg_kernel(a1_ref, a2_ref, r_ref, p_ref, s_ref, q_ref, *,
                 n_rows, tn, n_tiles):
    c = pl.program_id(0)   # 0: s-path (streams A1), 1: q-path (streams A2)
    n = pl.program_id(1)   # row-tile index along N

    # ---------------- s path: s += r_tile @ A1_tile ----------------
    @pl.when(c == 0)
    def _():
        @pl.when(n == 0)
        def _():
            s_ref[...] = jnp.zeros_like(s_ref)

        rem = n_rows % tn  # static Python int
        if rem == 0:
            # Every row tile is full: no masking needed anywhere.
            s_ref[...] += jnp.dot(
                r_ref[...], a1_ref[...], preferred_element_type=jnp.float32
            )
        else:
            @pl.when(n < n_tiles - 1)
            def _():
                s_ref[...] += jnp.dot(
                    r_ref[...], a1_ref[...], preferred_element_type=jnp.float32
                )

            @pl.when(n == n_tiles - 1)
            def _():
                # Ragged last tile: rows >= rem of the A1 block and lanes >= rem
                # of the r block hold stale VMEM (possibly NaN/Inf bit
                # patterns); zero both so garbage cannot contaminate the sum.
                row = lax.broadcasted_iota(jnp.int32, (tn, 1), 0)
                lane = lax.broadcasted_iota(jnp.int32, (1, tn), 1)
                a1_t = jnp.where(row < rem, a1_ref[...], 0.0)
                r_t = jnp.where(lane < rem, r_ref[...], 0.0)
                s_ref[...] += jnp.dot(
                    r_t, a1_t, preferred_element_type=jnp.float32
                )

    # ------------- q path: q_tile = (A2_tile @ p) as a lane-dense row -------
    @pl.when(c == 1)
    def _():
        # (1, M) . (tn, M)^T -> (1, tn); contracting the last dims keeps the
        # output lane-dense (no (M, 1) column operand; only the genuinely
        # ragged final block uses masked stores).
        q_ref[...] = lax.dot_general(
            p_ref[...],
            a2_ref[...],
            dimension_numbers=(((1,), (1,)), ((), ())),
            preferred_element_type=jnp.float32,
        )


def _pick_row_tile(n_rows, n_cols, *, target_step_bytes=4 << 20,
                   input_vmem_budget=32 << 20):
    """Row-tile height: ~target_step_bytes of matrix data per grid step,
    a multiple of 128, capped so 2 matrix inputs x 2 pipeline buffers of
    (tn, n_cols) f32 stay inside input_vmem_budget (safe for v7x's 64 MiB)."""
    row_bytes = 4 * n_cols
    tn = (target_step_bytes // row_bytes) // 128 * 128
    cap = (input_vmem_budget // (4 * row_bytes)) // 128 * 128
    tn = min(max(tn, 128), max(cap, 128))
    # No taller than N rounded up to a lane multiple.
    tn = min(tn, max(128, -(-n_rows // 128) * 128))
    return int(tn)


def bicg(A1, A2, r, p, *, tn=None):
    """Pallas implementation of the bicg forward pass.

    A1, A2: (N, M) float32;  r: (N,) float32;  p: (M,) float32.
    Returns (s, q) with s: (M,) = r @ A1 and q: (N,) = A2 @ p.
    """
    N, M = A1.shape
    assert A2.shape == (N, M)
    assert r.shape == (N,)
    assert p.shape == (M,)

    if tn is None:
        tn = _pick_row_tile(N, M)
    assert tn % 128 == 0

    n_tiles = -(-N // tn)
    assert n_tiles >= 1

    # Lane-dense row vectors (cheap reshapes; no padding copies of anything).
    r2 = r.reshape(1, N)
    p2 = p.reshape(1, M)

    # Scoped VMEM: 2 matrix inputs x 2 pipeline buffers, plus vectors, outputs
    # and headroom.  Tile cap above keeps this well under v7x's 64 MiB.
    in_tile_bytes = 4 * tn * M
    vmem_limit = int(min(max(4 * in_tile_bytes + (8 << 20), 32 << 20), 56 << 20))

    cost = pl.CostEstimate(
        flops=4 * N * M,                                # two vec-mat products
        transcendentals=0,
        bytes_accessed=2 * 4 * N * M + 4 * 2 * (N + M),
    )

    kernel = functools.partial(_bicg_kernel, n_rows=N, tn=tn, n_tiles=n_tiles)

    s_out, q_out = pl.pallas_call(
        kernel,
        out_shape=(
            jax.ShapeDtypeStruct((2, 1, M), jnp.float32),  # s (row 0 valid)
            jax.ShapeDtypeStruct((2, 1, N), jnp.float32),  # q (row 1 valid)
        ),
        grid_spec=pltpu.PrefetchScalarGridSpec(
            num_scalar_prefetch=0,
            grid=(2, n_tiles),
            in_specs=[
                # A1 streams on the s-chunk (c == 0); pinned to block 0 on c == 1.
                pl.BlockSpec((tn, M), lambda c, n: (n * (1 - c), 0)),
                # A2 streams on the q-chunk (c == 1); pinned to block 0 on c == 0.
                pl.BlockSpec((tn, M), lambda c, n: (n * c, 0)),
                # r streams with the s-chunk only.
                pl.BlockSpec((1, tn), lambda c, n: (0, n * (1 - c))),
                # p fully resident (fetched once).
                pl.BlockSpec((1, M), lambda c, n: (0, 0)),
            ],
            out_specs=(
                # Per-chunk s row; constant along the reduction axis, so the
                # accumulator lives in the output block itself.
                pl.BlockSpec((None, 1, M), lambda c, n: (c, 0, 0)),
                # Per-chunk q row, streamed lane-dense; pinned for the s-chunk.
                pl.BlockSpec((None, 1, tn), lambda c, n: (c, 0, n * c)),
            ),
        ),
        compiler_params=pltpu.CompilerParams(
            dimension_semantics=("parallel", "arbitrary"),
            vmem_limit_bytes=vmem_limit,
        ),
        cost_estimate=cost,
    )(A1, A2, r2, p2)

    s = s_out[0, 0]   # row 0: the s chunk's result
    q = q_out[1, 0]   # row 1: the q chunk's result
    return s, q


def _check(N, M, seed, tn=None):
    key = jax.random.PRNGKey(seed)
    k1, k2, k3, k4 = jax.random.split(key, 4)
    A1 = jax.random.normal(k1, (N, M), dtype=jnp.float32)
    A2 = jax.random.normal(k2, (N, M), dtype=jnp.float32)
    r = jax.random.normal(k3, (N,), dtype=jnp.float32)
    p = jax.random.normal(k4, (M,), dtype=jnp.float32)

    s, q = bicg(A1, A2, r, p, tn=tn)
    jax.block_until_ready((s, q))

    s_ref = r @ A1
    q_ref = A2 @ p
    assert jnp.allclose(s, s_ref, atol=1e-3, rtol=1e-3), "s mismatch"
    assert jnp.allclose(q, q_ref, atol=1e-3, rtol=1e-3), "q mismatch"


if __name__ == "__main__":
    # Deterministic small inputs consistent with the forward signature.
    # Case 1: N not a multiple of the tile -> exercises the ragged-tail mask.
    _check(300, 384, seed=0)
    # Case 2: several full tiles -> exercises multi-step s accumulation.
    _check(512, 256, seed=0, tn=128)

    print("KERNEL_OK")
</pallas_src>

<mosaic_0001>
module attributes {stable_mosaic.version = 11 : i64} {
  func.func @_bicg_kernel(%arg0: i32, %arg1: i32, %arg2: memref<384x384xf32, #tpu.memory_space<vmem>>, %arg3: memref<384x384xf32, #tpu.memory_space<vmem>>, %arg4: memref<1x384xf32, #tpu.memory_space<vmem>>, %arg5: memref<1x384xf32, #tpu.memory_space<vmem>>, %arg6: memref<1x1x384xf32, #tpu.memory_space<vmem>>, %arg7: memref<1x1x384xf32, #tpu.memory_space<vmem>>) attributes {dimension_semantics = [#tpu.dimension_semantics<parallel>, #tpu.dimension_semantics<arbitrary>], iteration_bounds = array<i64: 2, 1>, scalar_prefetch = 0 : i64, scratch_operands = 0 : i64, tpu.core_type = #tpu.core_type<tc>, window_params = [{transform_indices = @transform_0, window_bounds = array<i64: 384, 384>}, {transform_indices = @transform_1, window_bounds = array<i64: 384, 384>}, {transform_indices = @transform_2, window_bounds = array<i64: 1, 384>}, {pipeline_mode = #tpu.pipeline_mode<synchronous>, transform_indices = @transform_3, window_bounds = array<i64: 1, 384>}, {transform_indices = @transform_4, window_bounds = array<i64: 1, 1, 384>}, {transform_indices = @transform_5, window_bounds = array<i64: 1, 1, 384>}]} {
    %c0_i32 = arith.constant 0 : i32
    %0 = arith.cmpi eq, %arg0, %c0_i32 : i32
    %1 = arith.extui %0 : i1 to i32
    %c0_i32_0 = arith.constant 0 : i32
    %2 = arith.cmpi ne, %1, %c0_i32_0 : i32
    scf.if %2 {
      %c0_i32_2 = arith.constant 0 : i32
      %6 = arith.cmpi eq, %arg1, %c0_i32_2 : i32
      %7 = arith.extui %6 : i1 to i32
      %c0_i32_3 = arith.constant 0 : i32
      %8 = arith.cmpi ne, %7, %c0_i32_3 : i32
      scf.if %8 {
        %cst = arith.constant 0.000000e+00 : f32
        %15 = vector.broadcast %cst : f32 to vector<1x384xf32>
        %c0 = arith.constant 0 : index
        %c0_8 = arith.constant 0 : index
        %c0_9 = arith.constant 0 : index
        %16 = vector.load %arg6[%c0, %c0_8, %c0_9] : memref<1x1x384xf32, #tpu.memory_space<vmem>>, vector<1x1x384xf32>
        %17 = vector.shape_cast %16 : vector<1x1x384xf32> to vector<1x384xf32>
        %18 = vector.shape_cast %15 : vector<1x384xf32> to vector<1x1x384xf32>
        tpu.vector_store %arg6[%c0, %c0_8, %c0_9], %18 {strides = array<i32>} : memref<1x1x384xf32, #tpu.memory_space<vmem>>, vector<1x1x384xf32>,
      } else {
      }
      %c0_i32_4 = arith.constant 0 : i32
      %9 = arith.cmpi slt, %arg1, %c0_i32_4 : i32
      %10 = arith.extui %9 : i1 to i32
      %c0_i32_5 = arith.constant 0 : i32
      %11 = arith.cmpi ne, %10, %c0_i32_5 : i32
      scf.if %11 {
        %c0 = arith.constant 0 : index
        %c0_8 = arith.constant 0 : index
        %c0_9 = arith.constant 0 : index
        %15 = vector.load %arg6[%c0, %c0_8, %c0_9] : memref<1x1x384xf32, #tpu.memory_space<vmem>>, vector<1x1x384xf32>
        %16 = vector.shape_cast %15 : vector<1x1x384xf32> to vector<1x384xf32>
        %c0_10 = arith.constant 0 : index
        %c0_11 = arith.constant 0 : index
        %17 = vector.load %arg4[%c0_10, %c0_11] : memref<1x384xf32, #tpu.memory_space<vmem>>, vector<1x384xf32>
        %c0_12 = arith.constant 0 : index
        %c0_13 = arith.constant 0 : index
        %18 = vector.load %arg2[%c0_12, %c0_13] : memref<384x384xf32, #tpu.memory_space<vmem>>, vector<384x384xf32>
        %cst = arith.constant dense<0.000000e+00> : vector<1x384xf32>
        %19 = tpu.matmul %17, %18, %cst {dimension_numbers = #tpu.dot_dimension_numbers<[1], [0], [0], [1], [0, 0, 1, 1], [], []>} : vector<1x384xf32>, vector<384x384xf32>, vector<1x384xf32> -> vector<1x384xf32>
        %20 = arith.addf %16, %19 : vector<1x384xf32>
        %c0_14 = arith.constant 0 : index
        %c0_15 = arith.constant 0 : index
        %c0_16 = arith.constant 0 : index
        %21 = vector.load %arg6[%c0_14, %c0_15, %c0_16] : memref<1x1x384xf32, #tpu.memory_space<vmem>>, vector<1x1x384xf32>
        %22 = vector.shape_cast %21 : vector<1x1x384xf32> to vector<1x384xf32>
        %23 = vector.shape_cast %20 : vector<1x384xf32> to vector<1x1x384xf32>
        tpu.vector_store %arg6[%c0_14, %c0_15, %c0_16], %23 {strides = array<i32>} : memref<1x1x384xf32, #tpu.memory_space<vmem>>, vector<1x1x384xf32>,
      } else {
      }
      %c0_i32_6 = arith.constant 0 : i32
      %12 = arith.cmpi eq, %arg1, %c0_i32_6 : i32
      %13 = arith.extui %12 : i1 to i32
      %c0_i32_7 = arith.constant 0 : i32
      %14 = arith.cmpi ne, %13, %c0_i32_7 : i32
      scf.if %14 {
        %15 = tpu.iota {dimensions = array<i32: 0>} : vector<384x1xi32>
        %16 = tpu.iota {dimensions = array<i32: 1>} : vector<1x384xi32>
        %c300_i32 = arith.constant 300 : i32
        %17 = vector.broadcast %c300_i32 : i32 to vector<384x1xi32>
        %18 = arith.cmpi slt, %15, %17 : vector<384x1xi32>
        %c0 = arith.constant 0 : index
        %c0_8 = arith.constant 0 : index
        %19 = vector.load %arg2[%c0, %c0_8] : memref<384x384xf32, #tpu.memory_space<vmem>>, vector<384x384xf32>
        %cst = arith.constant 0.000000e+00 : f32
        %20 = vector.shape_cast %18 : vector<384x1xi1> to vector<384x1xi1>
        %21 = vector.broadcast %20 : vector<384x1xi1> to vector<384x384xi1>
        %22 = vector.broadcast %cst : f32 to vector<384x384xf32>
        %23 = arith.select %21, %19, %22 : vector<384x384xi1>, vector<384x384xf32>
        %c300_i32_9 = arith.constant 300 : i32
        %24 = vector.broadcast %c300_i32_9 : i32 to vector<1x384xi32>
        %25 = arith.cmpi slt, %16, %24 : vector<1x384xi32>
        %c0_10 = arith.constant 0 : index
        %c0_11 = arith.constant 0 : index
        %26 = vector.load %arg4[%c0_10, %c0_11] : memref<1x384xf32, #tpu.memory_space<vmem>>, vector<1x384xf32>
        %cst_12 = arith.constant 0.000000e+00 : f32
        %27 = vector.broadcast %cst_12 : f32 to vector<1x384xf32>
        %28 = arith.select %25, %26, %27 : vector<1x384xi1>, vector<1x384xf32>
        %c0_13 = arith.constant 0 : index
        %c0_14 = arith.constant 0 : index
        %c0_15 = arith.constant 0 : index
        %29 = vector.load %arg6[%c0_13, %c0_14, %c0_15] : memref<1x1x384xf32, #tpu.memory_space<vmem>>, vector<1x1x384xf32>
        %30 = vector.shape_cast %29 : vector<1x1x384xf32> to vector<1x384xf32>
        %cst_16 = arith.constant dense<0.000000e+00> : vector<1x384xf32>
        %31 = tpu.matmul %28, %23, %cst_16 {dimension_numbers = #tpu.dot_dimension_numbers<[1], [0], [0], [1], [0, 0, 1, 1], [], []>} : vector<1x384xf32>, vector<384x384xf32>, vector<1x384xf32> -> vector<1x384xf32>
        %32 = arith.addf %30, %31 : vector<1x384xf32>
        %c0_17 = arith.constant 0 : index
        %c0_18 = arith.constant 0 : index
        %c0_19 = arith.constant 0 : index
        %33 = vector.load %arg6[%c0_17, %c0_18, %c0_19] : memref<1x1x384xf32, #tpu.memory_space<vmem>>, vector<1x1x384xf32>
        %34 = vector.shape_cast %33 : vector<1x1x384xf32> to vector<1x384xf32>
        %35 = vector.shape_cast %32 : vector<1x384xf32> to vector<1x1x384xf32>
        tpu.vector_store %arg6[%c0_17, %c0_18, %c0_19], %35 {strides = array<i32>} : memref<1x1x384xf32, #tpu.memory_space<vmem>>, vector<1x1x384xf32>,
      } else {
      }
    } else {
    }
    %c1_i32 = arith.constant 1 : i32
    %3 = arith.cmpi eq, %arg0, %c1_i32 : i32
    %4 = arith.extui %3 : i1 to i32
    %c0_i32_1 = arith.constant 0 : i32
    %5 = arith.cmpi ne, %4, %c0_i32_1 : i32
    scf.if %5 {
      %c0 = arith.constant 0 : index
      %c0_2 = arith.constant 0 : index
      %6 = vector.load %arg5[%c0, %c0_2] : memref<1x384xf32, #tpu.memory_space<vmem>>, vector<1x384xf32>
      %c0_3 = arith.constant 0 : index
      %c0_4 = arith.constant 0 : index
      %7 = vector.load %arg3[%c0_3, %c0_4] : memref<384x384xf32, #tpu.memory_space<vmem>>, vector<384x384xf32>
      %cst = arith.constant dense<0.000000e+00> : vector<1x384xf32>
      %8 = tpu.matmul %6, %7, %cst {dimension_numbers = #tpu.dot_dimension_numbers<[1], [1], [0], [0], [0, 0, 1, 0], [], []>} : vector<1x384xf32>, vector<384x384xf32>, vector<1x384xf32> -> vector<1x384xf32>
      %c0_5 = arith.constant 0 : index
      %c0_6 = arith.constant 0 : index
      %c0_7 = arith.constant 0 : index
      %9 = vector.load %arg7[%c0_5, %c0_6, %c0_7] : memref<1x1x384xf32, #tpu.memory_space<vmem>>, vector<1x1x384xf32>
      %10 = vector.shape_cast %9 : vector<1x1x384xf32> to vector<1x384xf32>
      %11 = vector.shape_cast %8 : vector<1x384xf32> to vector<1x1x384xf32>
      tpu.vector_store %arg7[%c0_5, %c0_6, %c0_7], %11 {strides = array<i32>} : memref<1x1x384xf32, #tpu.memory_space<vmem>>, vector<1x1x384xf32>,
    } else {
    }
    return
  }
  func.func @transform_0(%arg0: i32, %arg1: i32) -> (i32, i32) {
    %c1_i32 = arith.constant 1 : i32
    %0 = arith.subi %c1_i32, %arg0 : i32
    %1 = arith.muli %arg1, %0 : i32
    %c0_i32 = arith.constant 0 : i32
    %c0_i32_0 = arith.constant 0 : i32
    return %1, %c0_i32 : i32, i32
  }
  func.func @transform_1(%arg0: i32, %arg1: i32) -> (i32, i32) {
    %0 = arith.muli %arg1, %arg0 : i32
    %c0_i32 = arith.constant 0 : i32
    %c0_i32_0 = arith.constant 0 : i32
    return %0, %c0_i32 : i32, i32
  }
  func.func @transform_2(%arg0: i32, %arg1: i32) -> (i32, i32) {
    %c1_i32 = arith.constant 1 : i32
    %0 = arith.subi %c1_i32, %arg0 : i32
    %1 = arith.muli %arg1, %0 : i32
    %c0_i32 = arith.constant 0 : i32
    %c0_i32_0 = arith.constant 0 : i32
    return %c0_i32, %1 : i32, i32
  }
  func.func @transform_3(%arg0: i32, %arg1: i32) -> (i32, i32) {
    %c0_i32 = arith.constant 0 : i32
    %c0_i32_0 = arith.constant 0 : i32
    %c0_i32_1 = arith.constant 0 : i32
    return %c0_i32, %c0_i32_0 : i32, i32
  }
  func.func @transform_4(%arg0: i32, %arg1: i32) -> (i32, i32, i32) {
    %c0_i32 = arith.constant 0 : i32
    %c0_i32_0 = arith.constant 0 : i32
    %c0_i32_1 = arith.constant 0 : i32
    return %arg0, %c0_i32, %c0_i32_0 : i32, i32, i32
  }
  func.func @transform_5(%arg0: i32, %arg1: i32) -> (i32, i32, i32) {
    %0 = arith.muli %arg1, %arg0 : i32
    %c0_i32 = arith.constant 0 : i32
    %c0_i32_0 = arith.constant 0 : i32
    return %arg0, %c0_i32, %0 : i32, i32, i32
  }
}

</mosaic_0001>

<llo_original>
// kernel: tpu_custom_call.1
$region0: #{tpu_custom_call.1}
  #allocation0 [shape = 'u32[]', space=smem, size = 0x4, offset = 0x4, fixed_abs, tag = 'smem constant byte address 0x4 - core index']
  #allocation1 [shape = 'u32[72,128]{1,0:T(1,128)}', space=vmem, size = 0x9000, scoped, tag = 'internal scratch']
  %s0 = inlined_call_operand.hbm [shape: f32[300,384], index: 0, kind: input, shape index: {}]
  %s1 = inlined_call_operand.hbm [shape: f32[300,384], index: 1, kind: input, shape index: {}]
  %s2 = inlined_call_operand.hbm [shape: f32[1,300], index: 2, kind: input, shape index: {}]
  %s3 = inlined_call_operand.hbm [shape: f32[1,384], index: 3, kind: input, shape index: {}]
  %s4 = inlined_call_operand.hbm [shape: f32[2,1,384], index: 4, kind: output, shape index: {0}]
  %s5 = inlined_call_operand.hbm [shape: f32[2,1,300], index: 5, kind: output, shape index: {1}]
  %6 = xla_tuple %s4, %s5
  %s7 = sld [smem:[#allocation0]]
  $region93: #{tpu_custom_call.1} parent=0
    _
  %s9 = ssub.s32 1, %s7
  %s10 = scalar_select 0, %s9, %s7
  $region1: #{tpu_custom_call.1} parent=0
    #allocation2 [shape = 'u8[1179648]{0}', space=vmem, size = 0x120000, scoped, tag = 'input window, operand 0']
    #allocation3 [shape = 's32[2]{0}', space=sflag, size = 0x8, scoped, tag = 'scoped memory for tpu_custom_call.1']
    #allocation4 [shape = 's32[2]{0}', space=sflag, size = 0x8, scoped, tag = 'scoped memory for tpu_custom_call.1']
    #allocation5 [shape = 'u8[1179648]{0}', space=vmem, size = 0x120000, scoped, tag = 'input window, operand 1']
    #allocation6 [shape = 's32[2]{0}', space=sflag, size = 0x8, scoped, tag = 'scoped memory for tpu_custom_call.1']
    #allocation7 [shape = 'u8[3072]{0}', space=vmem, size = 0xc00, scoped, tag = 'input window, operand 2']
    #allocation8 [shape = 'u8[1536]{0}', space=vmem, size = 0x800, scoped, tag = 'input window, operand 3, single buffered']
    #allocation9 [shape = 's32[1]{0}', space=sflag, size = 0x4, scoped, tag = 'scoped memory for tpu_custom_call.1']
    #allocation10 [shape = 'u8[3072]{0}', space=vmem, size = 0xc00, scoped, tag = 'output window, operand 0']
    #allocation11 [shape = 'u8[3072]{0}', space=vmem, size = 0xc00, scoped, tag = 'output window, operand 1']
    #allocation12 [shape = 's32[2]{0}', space=sflag, size = 0x8, scoped, tag = 'scoped memory for tpu_custom_call.1']
    %11 = vsyncpa [#allocation3], 0
    %s12 = scalar_lea.sflag [#allocation3], 1
    %13 = vsyncpa %s12, 0
    %14 = vsyncpa [#allocation6], 0
    %s15 = scalar_lea.sflag [#allocation6], 1
    %16 = vsyncpa %s15, 0
    %17 = vsyncpa [#allocation9], 0
    %18 = vsyncpa [#allocation4], 0
    %s19 = scalar_lea.sflag [#allocation4], 1
    %20 = vsyncpa %s19, 0
    %21 = vsyncpa [#allocation12], 0
    %s22 = scalar_lea.sflag [#allocation12], 1
    %23 = vsyncpa %s22, 0
    loop: start=0, step=1, limit=4
    $region2: #{tpu_custom_call.1} parent=1 // loop_pre_header
      _
    $region3: #{tpu_custom_call.1} parent=1 // loop_header
      %s25 = sphi 0, %s29
      %p26 = scmp.ge.s32.totalorder %s25, 4
      %s32 = sphi 0, %s44
      %s33 = sphi 0, %s40
      %s34 = sphi 0, %s32
      %s35 = sphi 0, %s33
      %s36 = sphi 0, %s34
      %s37 = sphi 0, %s35
      %s51 = sphi 0, %s53
      %s54 = sphi 0, %s51
      %s55 = sphi 0, %s54
      %s71 = sphi 0, %s55
      %s79 = sphi 0, %s81
      %s82 = sphi 0, %s79
      %s83 = sphi 0, %s82
      %s99 = sphi 0, %s83
      %s109 = sphi 0, %s111
      %s112 = sphi 0, %s109
      %s113 = sphi 0, %s112
      %s129 = sphi 0, %s113
      %s133 = sphi 0, %s133
      %s135 = sphi 0, %s133
      %s136 = sphi 0, %s135
      %s150 = sphi 0, %s136
      %s156 = sphi 0, %s158
      %s159 = sphi 0, %s156
      %s160 = sphi 0, %s159
      %s176 = sphi 0, %s160
      %s186 = sphi 0, %s188
      %s189 = sphi 0, %s186
      %s190 = sphi 0, %s189
      %s206 = sphi 0, %s190
    $region4: #{tpu_custom_call.1} parent=1 // loop_header_branch
      %28 = sbr.rel (%p26) target = $region8
    $region5: #{tpu_custom_call.1} parent=1 // loop_body
      %s30 = ssub.s32 %s25, 1
      %s31 = ssub.s32 %s25, 2
      %s38 = sadd.s32 1, %s33
      %p39 = scmp.ge.s32.totalorder %s38, 1
      %s40 = scalar_select %p39, 0, %s38
      %s41 = sadd.s32 1, %s32
      %s42 = scalar_select %p39, %s41, %s32
      %p43 = scmp.ge.s32.totalorder %s42, 2
      %s44 = scalar_select %p43, 0, %s42
      %s45 = ssub.s32 1, %s32
      %s46 = smul.u32 %s33, %s45
      %s47 = ssub.s32 1, %s44
      %s48 = smul.u32 %s40, %s47
      %s49 = ssub.s32 %s46, %s48
      %p50 = scmp.eq.s32.totalorder %s49, 0
      %s52 = sadd.s32 %s51, 1
      %s53 = scalar_select %p50, %s51, %s52
      %p56 = pneg %p50
      %p57 = scmp.eq.s32.totalorder %s25, 1
      %p58 = por %p56, %p57
      %p59 = scmp.ne.s32.totalorder %s51, %s54
      %p60 = scmp.eq.s32.totalorder %s25, 0
      %p61 = por %p59, %p60
      %p62 = scmp.ne.s32.totalorder %s51, %s54
      %p63 = scmp.eq.s32.totalorder %s30, 1
      %p64 = por %p62, %p63
      %p65 = scmp.ne.s32.totalorder %s54, %s55
      %p66 = scmp.eq.s32.totalorder %s30, 0
      %p67 = por %p65, %p66
      %p68 = scmp.ne.s32.totalorder %s54, %s55
      %p69 = scmp.eq.s32.totalorder %s31, 1
      %p70 = por %p68, %p69
      %p72 = scmp.ne.s32.totalorder %s55, %s71
      %p73 = scmp.eq.s32.totalorder %s31, 0
      %p74 = por %p72, %p73
      %s75 = smul.u32 %s33, %s32
      %s76 = smul.u32 %s40, %s44
      %s77 = ssub.s32 %s75, %s76
      %p78 = scmp.eq.s32.totalorder %s77, 0
      %s80 = sadd.s32 %s79, 1
      %s81 = scalar_select %p78, %s79, %s80
      %p84 = pneg %p78
      %p85 = scmp.eq.s32.totalorder %s25, 1
      %p86 = por %p84, %p85
      %p87 = scmp.ne.s32.totalorder %s79, %s82
      %p88 = scmp.eq.s32.totalorder %s25, 0
      %p89 = por %p87, %p88
      %p90 = scmp.ne.s32.totalorder %s79, %s82
      %p91 = scmp.eq.s32.totalorder %s30, 1
      %p92 = por %p90, %p91
      %p93 = scmp.ne.s32.totalorder %s82, %s83
      %p94 = scmp.eq.s32.totalorder %s30, 0
      %p95 = por %p93, %p94
      %p96 = scmp.ne.s32.totalorder %s82, %s83
      %p97 = scmp.eq.s32.totalorder %s31, 1
      %p98 = por %p96, %p97
      %p100 = scmp.ne.s32.totalorder %s83, %s99
      %p101 = scmp.eq.s32.totalorder %s31, 0
      %p102 = por %p100, %p101
      %s103 = ssub.s32 1, %s32
      %s104 = smul.u32 %s33, %s103
      %s105 = ssub.s32 1, %s44
      %s106 = smul.u32 %s40, %s105
      %s107 = ssub.s32 %s104, %s106
      %p108 = scmp.eq.s32.totalorder %s107, 0
      %s110 = sadd.s32 %s109, 1
      %s111 = scalar_select %p108, %s109, %s110
      %p114 = pneg %p108
      %p115 = scmp.eq.s32.totalorder %s25, 1
      %p116 = por %p114, %p115
      %p117 = scmp.ne.s32.totalorder %s109, %s112
      %p118 = scmp.eq.s32.totalorder %s25, 0
      %p119 = por %p117, %p118
      %p120 = scmp.ne.s32.totalorder %s109, %s112
      %p121 = scmp.eq.s32.totalorder %s30, 1
      %p122 = por %p120, %p121
      %p123 = scmp.ne.s32.totalorder %s112, %s113
      %p124 = scmp.eq.s32.totalorder %s30, 0
      %p125 = por %p123, %p124
      %p126 = scmp.ne.s32.totalorder %s112, %s113
      %p127 = scmp.eq.s32.totalorder %s31, 1
      %p128 = por %p126, %p127
      %p130 = scmp.ne.s32.totalorder %s113, %s129
      %p131 = scmp.eq.s32.totalorder %s31, 0
      %p132 = por %p130, %p131
      %s134 = sadd.s32 %s133, 1
      %p137 = scmp.eq.s32.totalorder %s25, 1
      %p138 = scmp.ne.s32.totalorder %s133, %s135
      %p139 = scmp.eq.s32.totalorder %s25, 0
      %p140 = por %p138, %p139
      %p141 = scmp.ne.s32.totalorder %s133, %s135
      %p142 = scmp.eq.s32.totalorder %s30, 1
      %p143 = por %p141, %p142
      %p144 = scmp.ne.s32.totalorder %s135, %s136
      %p145 = scmp.eq.s32.totalorder %s30, 0
      %p146 = por %p144, %p145
      %p147 = scmp.ne.s32.totalorder %s135, %s136
      %p148 = scmp.eq.s32.totalorder %s31, 1
      %p149 = por %p147, %p148
      %p151 = scmp.ne.s32.totalorder %s136, %s150
      %p152 = scmp.eq.s32.totalorder %s31, 0
      %p153 = por %p151, %p152
      %s154 = ssub.s32 %s32, %s44
      %p155 = scmp.eq.s32.totalorder %s154, 0
      %s157 = sadd.s32 %s156, 1
      %s158 = scalar_select %p155, %s156, %s157
      %p161 = pneg %p155
      %p162 = scmp.eq.s32.totalorder %s25, 1
      %p163 = por %p161, %p162
      %p164 = scmp.ne.s32.totalorder %s156, %s159
      %p165 = scmp.eq.s32.totalorder %s25, 0
      %p166 = por %p164, %p165
      %p167 = scmp.ne.s32.totalorder %s156, %s159
      %p168 = scmp.eq.s32.totalorder %s30, 1
      %p169 = por %p167, %p168
      %p170 = scmp.ne.s32.totalorder %s159, %s160
      %p171 = scmp.eq.s32.totalorder %s30, 0
      %p172 = por %p170, %p171
      %p173 = scmp.ne.s32.totalorder %s159, %s160
      %p174 = scmp.eq.s32.totalorder %s31, 1
      %p175 = por %p173, %p174
      %p177 = scmp.ne.s32.totalorder %s160, %s176
      %p178 = scmp.eq.s32.totalorder %s31, 0
      %p179 = por %p177, %p178
      %s180 = smul.u32 %s33, %s32
      %s181 = smul.u32 %s40, %s44
      %s182 = ssub.s32 %s32, %s44
      %s183 = ssub.s32 %s180, %s181
      %s184 = sor.u32 %s182, %s183
      %p185 = scmp.eq.s32.totalorder %s184, 0
      %s187 = sadd.s32 %s186, 1
      %s188 = scalar_select %p185, %s186, %s187
      %p191 = pneg %p185
      %p192 = scmp.eq.s32.totalorder %s25, 1
      %p193 = por %p191, %p192
      %p194 = scmp.ne.s32.totalorder %s186, %s189
      %p195 = scmp.eq.s32.totalorder %s25, 0
      %p196 = por %p194, %p195
      %p197 = scmp.ne.s32.totalorder %s186, %s189
      %p198 = scmp.eq.s32.totalorder %s30, 1
      %p199 = por %p197, %p198
      %p200 = scmp.ne.s32.totalorder %s189, %s190
      %p201 = scmp.eq.s32.totalorder %s30, 0
      %p202 = por %p200, %p201
      %p203 = scmp.ne.s32.totalorder %s189, %s190
      %p204 = scmp.eq.s32.totalorder %s31, 1
      %p205 = por %p203, %p204
      %p207 = scmp.ne.s32.totalorder %s190, %s206
      %p208 = scmp.eq.s32.totalorder %s31, 0
      %p209 = por %p207, %p208
      %p210 = scmp.le.s32.totalorder 1, %s25
      %p211 = scmp.lt.s32.totalorder %s25, 3
      %p212 = pnand %p210, %p211
      %p213 = pneg %p212
      // Predicated region
      $region9: #{tpu_custom_call.1} parent=5 // pred_check
        _
      $region10: #{tpu_custom_call.1} parent=5 // pred_check_branch
        %215 = sbr.rel (%p212) target = $region12
      $region11: #{tpu_custom_call.1} parent=5 // pred_region
        %s216 = ssub.s32 %s25, 1
        // Predicated region
        $region13: #{tpu_custom_call.1} parent=11 // pred_check
          %p217 = pneg %p146
        $region14: #{tpu_custom_call.1} parent=11 // pred_check_branch
          %219 = sbr.rel (%p217) target = $region16
        $region15: #{tpu_custom_call.1} parent=11 // pred_region
          %221 = vsyncadd [#allocation9], 0
          %s223 = sshll.u32 %s3, 4
          %s224 = int_to_ptr.hbm [resolvable:$true] %s223
          %s225 = sshll.u32 [#allocation8], 4
          %s226 = int_to_ptr.vmem [resolvable:$true] %s225
          %228 = dma.hbm_to_vmem [thread:$0]  %s224, 48, %s226, [#allocation9]
        $region16: #{tpu_custom_call.1} parent=11 // pred_fallthru
          _
      $region12: #{tpu_custom_call.1} parent=5 // pred_fallthru
        _
      %p229 = scmp.lt.s32.totalorder %s25, 2
      // Predicated region
      $region17: #{tpu_custom_call.1} parent=5 // pred_check
        %p230 = pneg %p229
      $region18: #{tpu_custom_call.1} parent=5 // pred_check_branch
        %232 = sbr.rel (%p230) target = $region20
      $region19: #{tpu_custom_call.1} parent=5 // pred_region
        // Predicated region
        $region21: #{tpu_custom_call.1} parent=19 // pred_check
          %p233 = pneg %p61
        $region22: #{tpu_custom_call.1} parent=19 // pred_check_branch
          %235 = sbr.rel (%p233) target = $region24
        $region23: #{tpu_custom_call.1} parent=19 // pred_region
          %s236 = sand.u32 %s51, 1
          %s237 = scalar_lea.sflag [#allocation3], %s236
          %s238 = sand.u32 %s51, 1
          %s239 = smul.addr %s238, 1152
          %s240 = scalar_lea.vmem [#allocation2], %s239
          %s241 = ssub.s32 1, %s32
          %s242 = smul.u32 %s33, %s241
          %s243 = smul.u32 48, %s242
          %s244 = ssub.s32 38, %s243
          %s245 = smul.u32 8, %s244
          %s246 = smul.u32 %s245, 3
          %s247 = ssub.s32 1152, %s246
          %s248 = sshll.u32 %s247, 4
          %249 = vsyncadd %s237, %s248
          %p250 = scmp.ne.s32.totalorder 0, %s246
          %s251 = smul.addr %s243, 3
          %s252 = smul.addr %s251, 8
          %s253 = scalar_lea.hbm %s0, %s252
          %s254 = smul.u32 24, %s244
          %s255 = sshll.u32 %s253, 4
          %s256 = int_to_ptr.hbm [resolvable:$true] %s255
          %s257 = sshll.u32 %s240, 4
          %s258 = int_to_ptr.vmem [resolvable:$true] %s257
          %s259 = sshll.u32 %s254, 4
          %263 = dma.hbm_to_vmem [thread:$0]  (%p250), %s256, %s259, %s258, %s237, 384, 384, 24
        $region24: #{tpu_custom_call.1} parent=19 // pred_fallthru
          _
        // Predicated region
        $region25: #{tpu_custom_call.1} parent=19 // pred_check
          %p264 = pneg %p89
        $region26: #{tpu_custom_call.1} parent=19 // pred_check_branch
          %266 = sbr.rel (%p264) target = $region28
        $region27: #{tpu_custom_call.1} parent=19 // pred_region
          %s267 = sand.u32 %s25, 1
          %s268 = scalar_lea.sflag [#allocation6], %s267
          %s269 = sand.u32 %s79, 1
          %s270 = smul.addr %s269, 1152
          %s271 = scalar_lea.vmem [#allocation5], %s270
          %s272 = smul.u32 %s33, %s32
          %s273 = smul.u32 48, %s272
          %s274 = ssub.s32 38, %s273
          %s275 = smul.u32 8, %s274
          %s276 = smul.u32 %s275, 3
          %s277 = ssub.s32 1152, %s276
          %s278 = sshll.u32 %s277, 4
          %279 = vsyncadd %s268, %s278
          %p280 = scmp.ne.s32.totalorder 0, %s276
          %s281 = smul.addr %s273, 3
          %s282 = smul.addr %s281, 8
          %s283 = scalar_lea.hbm %s1, %s282
          %s284 = smul.u32 24, %s274
          %s285 = sshll.u32 %s283, 4
          %s286 = int_to_ptr.hbm [resolvable:$true] %s285
          %s287 = sshll.u32 %s271, 4
          %s288 = int_to_ptr.vmem [resolvable:$true] %s287
          %s289 = sshll.u32 %s284, 4
          %293 = dma.hbm_to_vmem [thread:$0]  (%p280), %s286, %s289, %s288, %s268, 384, 384, 24
        $region28: #{tpu_custom_call.1} parent=19 // pred_fallthru
          _
        // Predicated region
        $region29: #{tpu_custom_call.1} parent=19 // pred_check
          %p294 = pneg %p119
        $region30: #{tpu_custom_call.1} parent=19 // pred_check_branch
          %296 = sbr.rel (%p294) target = $region32
        $region31: #{tpu_custom_call.1} parent=19 // pred_region
          %s297 = sand.u32 %s25, 1
          %s298 = scalar_lea.sflag [#allocation6], %s297
          %s299 = sand.u32 %s109, 1
          %s300 = smul.addr %s299, 3
          %s301 = scalar_lea.vmem [#allocation7], %s300
          %s302 = ssub.s32 1, %s32
          %s303 = smul.u32 %s33, %s302
          %s304 = smul.u32 3, %s303
          %306 = vsyncadd %s298, 0
          %s307 = scalar_lea.hbm %s2, %s304
          %s309 = sshll.u32 %s307, 4
          %s310 = int_to_ptr.hbm [resolvable:$true] %s309
          %s311 = sshll.u32 %s301, 4
          %s312 = int_to_ptr.vmem [resolvable:$true] %s311
          %314 = dma.hbm_to_vmem [thread:$0]  %s310, 48, %s312, %s298
        $region32: #{tpu_custom_call.1} parent=19 // pred_fallthru
          _
      $region20: #{tpu_custom_call.1} parent=5 // pred_fallthru
        _
      %p315 = scmp.le.s32.totalorder 1, %s25
      %p316 = scmp.lt.s32.totalorder %s25, 3
      %p317 = pnand %p315, %p316
      %p318 = pneg %p317
      // Predicated region
      $region33: #{tpu_custom_call.1} parent=5 // pred_check
        _
      $region34: #{tpu_custom_call.1} parent=5 // pred_check_branch
        %320 = sbr.rel (%p317) target = $region36
      $region35: #{tpu_custom_call.1} parent=5 // pred_region
        %s321 = ssub.s32 %s25, 1
        %s322 = sand.u32 %s54, 1
        %s323 = scalar_lea.sflag [#allocation3], %s322
        %s324 = sand.u32 %s54, 1
        %s325 = smul.addr %s324, 1152
        %s326 = scalar_lea.vmem [#allocation2], %s325
        // Predicated region
        $region37: #{tpu_custom_call.1} parent=35 // pred_check
          %p327 = pneg %p67
        $region38: #{tpu_custom_call.1} parent=35 // pred_check_branch
          %329 = sbr.rel (%p327) target = $region40
        $region39: #{tpu_custom_call.1} parent=35 // pred_region
          %331 = dma.done %s323, 18432
        $region40: #{tpu_custom_call.1} parent=35 // pred_fallthru
          _
        %s332 = sand.u32 %s30, 1
        %s333 = scalar_lea.sflag [#allocation6], %s332
        %s334 = sand.u32 %s82, 1
        %s335 = smul.addr %s334, 1152
        %s336 = scalar_lea.vmem [#allocation5], %s335
        // Predicated region
        $region41: #{tpu_custom_call.1} parent=35 // pred_check
          %p337 = pneg %p95
        $region42: #{tpu_custom_call.1} parent=35 // pred_check_branch
          %339 = sbr.rel (%p337) target = $region44
        $region43: #{tpu_custom_call.1} parent=35 // pred_region
          %341 = dma.done %s333, 18432
        $region44: #{tpu_custom_call.1} parent=35 // pred_fallthru
          _
        %s342 = sand.u32 %s30, 1
        %s343 = scalar_lea.sflag [#allocation6], %s342
        %s344 = sand.u32 %s112, 1
        %s345 = smul.addr %s344, 3
        %s346 = scalar_lea.vmem [#allocation7], %s345
        // Predicated region
        $region45: #{tpu_custom_call.1} parent=35 // pred_check
          %p347 = pneg %p125
        $region46: #{tpu_custom_call.1} parent=35 // pred_check_branch
          %349 = sbr.rel (%p347) target = $region48
        $region47: #{tpu_custom_call.1} parent=35 // pred_region
          %351 = dma.done %s343, 48
        $region48: #{tpu_custom_call.1} parent=35 // pred_fallthru
          _
        // Predicated region
        $region49: #{tpu_custom_call.1} parent=35 // pred_check
          %p352 = pneg %p146
        $region50: #{tpu_custom_call.1} parent=35 // pred_check_branch
          %354 = sbr.rel (%p352) target = $region52
        $region51: #{tpu_custom_call.1} parent=35 // pred_region
          %356 = dma.done [#allocation9], 48
        $region52: #{tpu_custom_call.1} parent=35 // pred_fallthru
          _
        %s357 = sand.u32 %s54, 1
        %s358 = scalar_lea.sflag [#allocation3], %s357
        %s359 = sand.u32 %s54, 1
        %s360 = smul.addr %s359, 1152
        %s361 = scalar_lea.vmem [#allocation2], %s360
        %p362 = pneg %p67
        %p363 = pneg %p64
        %s364 = sand.u32 %s30, 1
        %s365 = scalar_lea.sflag [#allocation6], %s364
        %s366 = sand.u32 %s82, 1
        %s367 = smul.addr %s366, 1152
        %s368 = scalar_lea.vmem [#allocation5], %s367
        %p369 = pneg %p95
        %p370 = pneg %p92
        %s371 = sand.u32 %s30, 1
        %s372 = scalar_lea.sflag [#allocation6], %s371
        %s373 = sand.u32 %s112, 1
        %s374 = smul.addr %s373, 3
        %s375 = scalar_lea.vmem [#allocation7], %s374
        %p376 = pneg %p125
        %p377 = pneg %p122
        %p378 = pneg %p146
        %p379 = pneg %p143
        %p380 = pneg %p172
        %p381 = pneg %p169
        %s382 = sand.u32 %s159, 1
        %s383 = scalar_lea.sflag [#allocation4], %s382
        %s384 = sand.u32 %s159, 1
        %s385 = smul.addr %s384, 3
        %s386 = scalar_lea.vmem [#allocation10], %s385
        %p387 = pneg %p202
        %p388 = pneg %p199
        %s389 = sand.u32 %s189, 1
        %s390 = scalar_lea.sflag [#allocation12], %s389
        %s391 = sand.u32 %s189, 1
        %s392 = smul.addr %s391, 3
        %s393 = scalar_lea.vmem [#allocation11], %s392
        %s394 = ssub.s32 1, %s34
        %s395 = smul.u32 %s35, %s394
        %s396 = smul.u32 48, %s395
        %s397 = ssub.s32 38, %s396
        %s398 = smul.u32 8, %s397
        %s399 = smul.u32 %s398, 3
        %s400 = smul.u32 %s35, %s34
        %s401 = smul.u32 48, %s400
        %s402 = ssub.s32 38, %s401
        %s403 = smul.u32 8, %s402
        %s404 = smul.u32 %s403, 3
        %s405 = ssub.s32 1, %s34
        %s406 = smul.u32 %s35, %s405
        %s407 = smul.u32 3, %s406
        %s408 = smul.u32 %s35, %s34
        %s409 = smul.u32 3, %s408
        %p410 = scmp.eq.s32.totalorder %s34, 0
        // Predicated region
        $region53: #{tpu_custom_call.1} parent=35 // pred_check
          %p411 = pneg %p410
        $region54: #{tpu_custom_call.1} parent=35 // pred_check_branch
          %413 = sbr.rel (%p411) target = $region56
        $region55: #{tpu_custom_call.1} parent=35 // pred_region
          %p414 = scmp.eq.s32.totalorder %s35, 0
          // Predicated region
          $region57: #{tpu_custom_call.1} parent=55 // pred_check
            %p415 = pneg %p414
          $region58: #{tpu_custom_call.1} parent=55 // pred_check_branch
            %417 = sbr.rel (%p415) target = $region60
          $region59: #{tpu_custom_call.1} parent=55 // pred_region
            %v418 = vlaneseq
            %vm419 = vcmp.ge.s32.totalorder %v418, 0
            %vm420 = vcmp.lt.s32.totalorder %v418, 384
            %vm421 = vmand %vm419, %vm420
            %422 = vst.msk [vmem:[%s386] sm:$0x7] %vm421, 0.0
          $region60: #{tpu_custom_call.1} parent=55 // pred_fallthru
            _
          %p423 = scmp.lt.s32.totalorder %s35, 0
          // Predicated region
          $region61: #{tpu_custom_call.1} parent=55 // pred_check
            %p424 = pneg %p423
          $region62: #{tpu_custom_call.1} parent=55 // pred_check_branch
            %426 = sbr.rel (%p424) target = $region64
          $region63: #{tpu_custom_call.1} parent=55 // pred_region
            %v427 = vld [vmem:[%s386] sm:$0x7]
            %v428 = vld [vmem:[%s346] sm:$0x7]
            %v429 = vld [vmem:[%s326] sm:$0xff]
            %v430 = vld [vmem:[%s326 + $0x8] sm:$0xff]
            %v431 = vld [vmem:[%s326 + $0x10] sm:$0xff]
            %v432 = vld [vmem:[%s326 + $0x18] sm:$0xff]
            %v433 = vld [vmem:[%s326 + $0x20] sm:$0xff]
            %v434 = vld [vmem:[%s326 + $0x28] sm:$0xff]
            %v435 = vld [vmem:[%s326 + $0x30] sm:$0xff]
            %v436 = vld [vmem:[%s326 + $0x38] sm:$0xff]
            %v437 = vld [vmem:[%s326 + $0x40] sm:$0xff]
            %v438 = vld [vmem:[%s326 + $0x48] sm:$0xff]
            %v439 = vld [vmem:[%s326 + $0x50] sm:$0xff]
            %v440 = vld [vmem:[%s326 + $0x58] sm:$0xff]
            %v441 = vld [vmem:[%s326 + $0x60] sm:$0xff]
            %v442 = vld [vmem:[%s326 + $0x68] sm:$0xff]
            %v443 = vld [vmem:[%s326 + $0x70] sm:$0xff]
            %v444 = vld [vmem:[%s326 + $0x78] sm:$0xff]
            %v445 = vld [vmem:[%s326 + $0x80] sm:$0xff]
            %v446 = vld [vmem:[%s326 + $0x88] sm:$0xff]
            %v447 = vld [vmem:[%s326 + $0x90] sm:$0xff]
            %v448 = vld [vmem:[%s326 + $0x98] sm:$0xff]
            %v449 = vld [vmem:[%s326 + $0xa0] sm:$0xff]
            %v450 = vld [vmem:[%s326 + $0xa8] sm:$0xff]
            %v451 = vld [vmem:[%s326 + $0xb0] sm:$0xff]
            %v452 = vld [vmem:[%s326 + $0xb8] sm:$0xff]
            %v453 = vld [vmem:[%s326 + $0xc0] sm:$0xff]
            %v454 = vld [vmem:[%s326 + $0xc8] sm:$0xff]
            %v455 = vld [vmem:[%s326 + $0xd0] sm:$0xff]
            %v456 = vld [vmem:[%s326 + $0xd8] sm:$0xff]
            %v457 = vld [vmem:[%s326 + $0xe0] sm:$0xff]
            %v458 = vld [vmem:[%s326 + $0xe8] sm:$0xff]
            %v459 = vld [vmem:[%s326 + $0xf0] sm:$0xff]
            %v460 = vld [vmem:[%s326 + $0xf8] sm:$0xff]
            %v461 = vld [vmem:[%s326 + $0x100] sm:$0xff]
            %v462 = vld [vmem:[%s326 + $0x108] sm:$0xff]
            %v463 = vld [vmem:[%s326 + $0x110] sm:$0xff]
            %v464 = vld [vmem:[%s326 + $0x118] sm:$0xff]
            %v465 = vld [vmem:[%s326 + $0x120] sm:$0xff]
            %v466 = vld [vmem:[%s326 + $0x128] sm:$0xff]
            %v467 = vld [vmem:[%s326 + $0x130] sm:$0xff]
            %v468 = vld [vmem:[%s326 + $0x138] sm:$0xff]
            %v469 = vld [vmem:[%s326 + $0x140] sm:$0xff]
            %v470 = vld [vmem:[%s326 + $0x148] sm:$0xff]
            %v471 = vld [vmem:[%s326 + $0x150] sm:$0xff]
            %v472 = vld [vmem:[%s326 + $0x158] sm:$0xff]
            %v473 = vld [vmem:[%s326 + $0x160] sm:$0xff]
            %v474 = vld [vmem:[%s326 + $0x168] sm:$0xff]
            %v475 = vld [vmem:[%s326 + $0x170] sm:$0xff]
            %v476 = vld [vmem:[%s326 + $0x178] sm:$0xff]
            %v477 = vld [vmem:[%s326 + $0x180] sm:$0xff]
            %v478 = vld [vmem:[%s326 + $0x188] sm:$0xff]
            %v479 = vld [vmem:[%s326 + $0x190] sm:$0xff]
            %v480 = vld [vmem:[%s326 + $0x198] sm:$0xff]
            %v481 = vld [vmem:[%s326 + $0x1a0] sm:$0xff]
            %v482 = vld [vmem:[%s326 + $0x1a8] sm:$0xff]
            %v483 = vld [vmem:[%s326 + $0x1b0] sm:$0xff]
            %v484 = vld [vmem:[%s326 + $0x1b8] sm:$0xff]
            %v485 = vld [vmem:[%s326 + $0x1c0] sm:$0xff]
            %v486 = vld [vmem:[%s326 + $0x1c8] sm:$0xff]
            %v487 = vld [vmem:[%s326 + $0x1d0] sm:$0xff]
            %v488 = vld [vmem:[%s326 + $0x1d8] sm:$0xff]
            %v489 = vld [vmem:[%s326 + $0x1e0] sm:$0xff]
            %v490 = vld [vmem:[%s326 + $0x1e8] sm:$0xff]
            %v491 = vld [vmem:[%s326 + $0x1f0] sm:$0xff]
            %v492 = vld [vmem:[%s326 + $0x1f8] sm:$0xff]
            %v493 = vld [vmem:[%s326 + $0x200] sm:$0xff]
            %v494 = vld [vmem:[%s326 + $0x208] sm:$0xff]
            %v495 = vld [vmem:[%s326 + $0x210] sm:$0xff]
            %v496 = vld [vmem:[%s326 + $0x218] sm:$0xff]
            %v497 = vld [vmem:[%s326 + $0x220] sm:$0xff]
            %v498 = vld [vmem:[%s326 + $0x228] sm:$0xff]
            %v499 = vld [vmem:[%s326 + $0x230] sm:$0xff]
            %v500 = vld [vmem:[%s326 + $0x238] sm:$0xff]
            %v501 = vld [vmem:[%s326 + $0x240] sm:$0xff]
            %v502 = vld [vmem:[%s326 + $0x248] sm:$0xff]
            %v503 = vld [vmem:[%s326 + $0x250] sm:$0xff]
            %v504 = vld [vmem:[%s326 + $0x258] sm:$0xff]
            %v505 = vld [vmem:[%s326 + $0x260] sm:$0xff]
            %v506 = vld [vmem:[%s326 + $0x268] sm:$0xff]
            %v507 = vld [vmem:[%s326 + $0x270] sm:$0xff]
            %v508 = vld [vmem:[%s326 + $0x278] sm:$0xff]
            %v509 = vld [vmem:[%s326 + $0x280] sm:$0xff]
            %v510 = vld [vmem:[%s326 + $0x288] sm:$0xff]
            %v511 = vld [vmem:[%s326 + $0x290] sm:$0xff]
            %v512 = vld [vmem:[%s326 + $0x298] sm:$0xff]
            %v513 = vld [vmem:[%s326 + $0x2a0] sm:$0xff]
            %v514 = vld [vmem:[%s326 + $0x2a8] sm:$0xff]
            %v515 = vld [vmem:[%s326 + $0x2b0] sm:$0xff]
            %v516 = vld [vmem:[%s326 + $0x2b8] sm:$0xff]
            %v517 = vld [vmem:[%s326 + $0x2c0] sm:$0xff]
            %v518 = vld [vmem:[%s326 + $0x2c8] sm:$0xff]
            %v519 = vld [vmem:[%s326 + $0x2d0] sm:$0xff]
            %v520 = vld [vmem:[%s326 + $0x2d8] sm:$0xff]
            %v521 = vld [vmem:[%s326 + $0x2e0] sm:$0xff]
            %v522 = vld [vmem:[%s326 + $0x2e8] sm:$0xff]
            %v523 = vld [vmem:[%s326 + $0x2f0] sm:$0xff]
            %v524 = vld [vmem:[%s326 + $0x2f8] sm:$0xff]
            %v525 = vld [vmem:[%s326 + $0x300] sm:$0xff]
            %v526 = vld [vmem:[%s326 + $0x308] sm:$0xff]
            %v527 = vld [vmem:[%s326 + $0x310] sm:$0xff]
            %v528 = vld [vmem:[%s326 + $0x318] sm:$0xff]
            %v529 = vld [vmem:[%s326 + $0x320] sm:$0xff]
            %v530 = vld [vmem:[%s326 + $0x328] sm:$0xff]
            %v531 = vld [vmem:[%s326 + $0x330] sm:$0xff]
            %v532 = vld [vmem:[%s326 + $0x338] sm:$0xff]
            %v533 = vld [vmem:[%s326 + $0x340] sm:$0xff]
            %v534 = vld [vmem:[%s326 + $0x348] sm:$0xff]
            %v535 = vld [vmem:[%s326 + $0x350] sm:$0xff]
            %v536 = vld [vmem:[%s326 + $0x358] sm:$0xff]
            %v537 = vld [vmem:[%s326 + $0x360] sm:$0xff]
            %v538 = vld [vmem:[%s326 + $0x368] sm:$0xff]
            %v539 = vld [vmem:[%s326 + $0x370] sm:$0xff]
            %v540 = vld [vmem:[%s326 + $0x378] sm:$0xff]
            %v541 = vld [vmem:[%s326 + $0x380] sm:$0xff]
            %v542 = vld [vmem:[%s326 + $0x388] sm:$0xff]
            %v543 = vld [vmem:[%s326 + $0x390] sm:$0xff]
            %v544 = vld [vmem:[%s326 + $0x398] sm:$0xff]
            %v545 = vld [vmem:[%s326 + $0x3a0] sm:$0xff]
            %v546 = vld [vmem:[%s326 + $0x3a8] sm:$0xff]
            %v547 = vld [vmem:[%s326 + $0x3b0] sm:$0xff]
            %v548 = vld [vmem:[%s326 + $0x3b8] sm:$0xff]
            %v549 = vld [vmem:[%s326 + $0x3c0] sm:$0xff]
            %v550 = vld [vmem:[%s326 + $0x3c8] sm:$0xff]
            %v551 = vld [vmem:[%s326 + $0x3d0] sm:$0xff]
            %v552 = vld [vmem:[%s326 + $0x3d8] sm:$0xff]
            %v553 = vld [vmem:[%s326 + $0x3e0] sm:$0xff]
            %v554 = vld [vmem:[%s326 + $0x3e8] sm:$0xff]
            %v555 = vld [vmem:[%s326 + $0x3f0] sm:$0xff]
            %v556 = vld [vmem:[%s326 + $0x3f8] sm:$0xff]
            %v557 = vld [vmem:[%s326 + $0x400] sm:$0xff]
            %v558 = vld [vmem:[%s326 + $0x408] sm:$0xff]
            %v559 = vld [vmem:[%s326 + $0x410] sm:$0xff]
            %v560 = vld [vmem:[%s326 + $0x418] sm:$0xff]
            %v561 = vld [vmem:[%s326 + $0x420] sm:$0xff]
            %v562 = vld [vmem:[%s326 + $0x428] sm:$0xff]
            %v563 = vld [vmem:[%s326 + $0x430] sm:$0xff]
            %v564 = vld [vmem:[%s326 + $0x438] sm:$0xff]
            %v565 = vld [vmem:[%s326 + $0x440] sm:$0xff]
            %v566 = vld [vmem:[%s326 + $0x448] sm:$0xff]
            %v567 = vld [vmem:[%s326 + $0x450] sm:$0xff]
            %v568 = vld [vmem:[%s326 + $0x458] sm:$0xff]
            %v569 = vld [vmem:[%s326 + $0x460] sm:$0xff]
            %v570 = vld [vmem:[%s326 + $0x468] sm:$0xff]
            %v571 = vld [vmem:[%s326 + $0x470] sm:$0xff]
            %v572 = vld [vmem:[%s326 + $0x478] sm:$0xff]
            %v574 = vperm.slane %v428, 0
            %v575 = vperm.slane %v428, 1
            %v576 = vperm.slane %v428, 2
            %580 = vmatpush.msra.mxu0 %v474
            %581 = vmatpush.msra.mxu0 %v471
            %582 = vmatpush.msra.mxu0 %v468
            %583 = vmatpush.msra.mxu0 %v465
            %584 = vmatpush.msra.mxu0 %v462
            %585 = vmatpush.msra.mxu0 %v459
            %586 = vmatpush.msra.mxu0 %v456
            %587 = vmatpush.msra.mxu0 %v453
            %588 = vmatpush.msra.mxu0 %v450
            %589 = vmatpush.msra.mxu0 %v447
            %590 = vmatpush.msra.mxu0 %v444
            %591 = vmatpush.msra.mxu0 %v441
            %592 = vmatpush.msra.mxu0 %v438
            %593 = vmatpush.msra.mxu0 %v435
            %594 = vmatpush.msra.mxu0 %v432
            %595 = vmatpush.msra.mxu0 %v429
            %596 = vmatmul.f32.gmra.mxu0 %v574
            %v597 = vpop.f32.mrf.mxu0
            %v598 = vadd.f32 0.0, %v597
            %599 = vdwg.mxu0
            %600 = vmatpush.msra.mxu0 %v522
            %601 = vmatpush.msra.mxu0 %v519
            %602 = vmatpush.msra.mxu0 %v516
            %603 = vmatpush.msra.mxu0 %v513
            %604 = vmatpush.msra.mxu0 %v510
            %605 = vmatpush.msra.mxu0 %v507
            %606 = vmatpush.msra.mxu0 %v504
            %607 = vmatpush.msra.mxu0 %v501
            %608 = vmatpush.msra.mxu0 %v498
            %609 = vmatpush.msra.mxu0 %v495
            %610 = vmatpush.msra.mxu0 %v492
            %611 = vmatpush.msra.mxu0 %v489
            %612 = vmatpush.msra.mxu0 %v486
            %613 = vmatpush.msra.mxu0 %v483
            %614 = vmatpush.msra.mxu0 %v480
            %615 = vmatpush.msra.mxu0 %v477
            %616 = vmatmul.f32.gmra.mxu0 %v575
            %v617 = vpop.f32.mrf.mxu0
            %v618 = vadd.f32 %v598, %v617
            %619 = vdwg.mxu0
            %620 = vmatpush.msra.mxu0 %v570
            %621 = vmatpush.msra.mxu0 %v567
            %622 = vmatpush.msra.mxu0 %v564
            %623 = vmatpush.msra.mxu0 %v561
            %624 = vmatpush.msra.mxu0 %v558
            %625 = vmatpush.msra.mxu0 %v555
            %626 = vmatpush.msra.mxu0 %v552
            %627 = vmatpush.msra.mxu0 %v549
            %628 = vmatpush.msra.mxu0 %v546
            %629 = vmatpush.msra.mxu0 %v543
            %630 = vmatpush.msra.mxu0 %v540
            %631 = vmatpush.msra.mxu0 %v537
            %632 = vmatpush.msra.mxu0 %v534
            %633 = vmatpush.msra.mxu0 %v531
            %634 = vmatpush.msra.mxu0 %v528
            %635 = vmatpush.msra.mxu0 %v525
            %636 = vmatmul.f32.gmra.mxu0 %v576
            %v637 = vpop.f32.mrf.mxu0
            %v638 = vadd.f32 %v618, %v637
            %639 = vdwg.mxu0
            %640 = vmatpush.msra.mxu0 %v475
            %641 = vmatpush.msra.mxu0 %v472
            %642 = vmatpush.msra.mxu0 %v469
            %643 = vmatpush.msra.mxu0 %v466
            %644 = vmatpush.msra.mxu0 %v463
            %645 = vmatpush.msra.mxu0 %v460
            %646 = vmatpush.msra.mxu0 %v457
            %647 = vmatpush.msra.mxu0 %v454
            %648 = vmatpush.msra.mxu0 %v451
            %649 = vmatpush.msra.mxu0 %v448
            %650 = vmatpush.msra.mxu0 %v445
            %651 = vmatpush.msra.mxu0 %v442
            %652 = vmatpush.msra.mxu0 %v439
            %653 = vmatpush.msra.mxu0 %v436
            %654 = vmatpush.msra.mxu0 %v433
            %655 = vmatpush.msra.mxu0 %v430
            %656 = vmatmul.f32.gmra.mxu0 %v574
            %v657 = vpop.f32.mrf.mxu0
            %v658 = vadd.f32 0.0, %v657
            %659 = vdwg.mxu0
            %660 = vmatpush.msra.mxu0 %v523
            %661 = vmatpush.msra.mxu0 %v520
            %662 = vmatpush.msra.mxu0 %v517
            %663 = vmatpush.msra.mxu0 %v514
            %664 = vmatpush.msra.mxu0 %v511
            %665 = vmatpush.msra.mxu0 %v508
            %666 = vmatpush.msra.mxu0 %v505
            %667 = vmatpush.msra.mxu0 %v502
            %668 = vmatpush.msra.mxu0 %v499
            %669 = vmatpush.msra.mxu0 %v496
            %670 = vmatpush.msra.mxu0 %v493
            %671 = vmatpush.msra.mxu0 %v490
            %672 = vmatpush.msra.mxu0 %v487
            %673 = vmatpush.msra.mxu0 %v484
            %674 = vmatpush.msra.mxu0 %v481
            %675 = vmatpush.msra.mxu0 %v478
            %676 = vmatmul.f32.gmra.mxu0 %v575
            %v677 = vpop.f32.mrf.mxu0
            %v678 = vadd.f32 %v658, %v677
            %679 = vdwg.mxu0
            %680 = vmatpush.msra.mxu0 %v571
            %681 = vmatpush.msra.mxu0 %v568
            %682 = vmatpush.msra.mxu0 %v565
            %683 = vmatpush.msra.mxu0 %v562
            %684 = vmatpush.msra.mxu0 %v559
            %685 = vmatpush.msra.mxu0 %v556
            %686 = vmatpush.msra.mxu0 %v553
            %687 = vmatpush.msra.mxu0 %v550
            %688 = vmatpush.msra.mxu0 %v547
            %689 = vmatpush.msra.mxu0 %v544
            %690 = vmatpush.msra.mxu0 %v541
            %691 = vmatpush.msra.mxu0 %v538
            %692 = vmatpush.msra.mxu0 %v535
            %693 = vmatpush.msra.mxu0 %v532
            %694 = vmatpush.msra.mxu0 %v529
            %695 = vmatpush.msra.mxu0 %v526
            %696 = vmatmul.f32.gmra.mxu0 %v576
            %v697 = vpop.f32.mrf.mxu0
            %v698 = vadd.f32 %v678, %v697
            %699 = vdwg.mxu0
            %700 = vmatpush.msra.mxu0 %v476
            %701 = vmatpush.msra.mxu0 %v473
            %702 = vmatpush.msra.mxu0 %v470
            %703 = vmatpush.msra.mxu0 %v467
            %704 = vmatpush.msra.mxu0 %v464
            %705 = vmatpush.msra.mxu0 %v461
            %706 = vmatpush.msra.mxu0 %v458
            %707 = vmatpush.msra.mxu0 %v455
            %708 = vmatpush.msra.mxu0 %v452
            %709 = vmatpush.msra.mxu0 %v449
            %710 = vmatpush.msra.mxu0 %v446
            %711 = vmatpush.msra.mxu0 %v443
            %712 = vmatpush.msra.mxu0 %v440
            %713 = vmatpush.msra.mxu0 %v437
            %714 = vmatpush.msra.mxu0 %v434
            %715 = vmatpush.msra.mxu0 %v431
            %716 = vmatmul.f32.gmra.mxu0 %v574
            %v717 = vpop.f32.mrf.mxu0
            %v718 = vadd.f32 0.0, %v717
            %719 = vdwg.mxu0
            %720 = vmatpush.msra.mxu0 %v524
            %721 = vmatpush.msra.mxu0 %v521
            %722 = vmatpush.msra.mxu0 %v518
            %723 = vmatpush.msra.mxu0 %v515
            %724 = vmatpush.msra.mxu0 %v512
            %725 = vmatpush.msra.mxu0 %v509
            %726 = vmatpush.msra.mxu0 %v506
            %727 = vmatpush.msra.mxu0 %v503
            %728 = vmatpush.msra.mxu0 %v500
            %729 = vmatpush.msra.mxu0 %v497
            %730 = vmatpush.msra.mxu0 %v494
            %731 = vmatpush.msra.mxu0 %v491
            %732 = vmatpush.msra.mxu0 %v488
            %733 = vmatpush.msra.mxu0 %v485
            %734 = vmatpush.msra.mxu0 %v482
            %735 = vmatpush.msra.mxu0 %v479
            %736 = vmatmul.f32.gmra.mxu0 %v575
            %v737 = vpop.f32.mrf.mxu0
            %v738 = vadd.f32 %v718, %v737
            %739 = vdwg.mxu0
            %740 = vmatpush.msra.mxu0 %v572
            %741 = vmatpush.msra.mxu0 %v569
            %742 = vmatpush.msra.mxu0 %v566
            %743 = vmatpush.msra.mxu0 %v563
            %744 = vmatpush.msra.mxu0 %v560
            %745 = vmatpush.msra.mxu0 %v557
            %746 = vmatpush.msra.mxu0 %v554
            %747 = vmatpush.msra.mxu0 %v551
            %748 = vmatpush.msra.mxu0 %v548
            %749 = vmatpush.msra.mxu0 %v545
            %750 = vmatpush.msra.mxu0 %v542
            %751 = vmatpush.msra.mxu0 %v539
            %752 = vmatpush.msra.mxu0 %v536
            %753 = vmatpush.msra.mxu0 %v533
            %754 = vmatpush.msra.mxu0 %v530
            %755 = vmatpush.msra.mxu0 %v527
            %756 = vmatmul.f32.gmra.mxu0 %v576
            %v757 = vpop.f32.mrf.mxu0
            %v758 = vadd.f32 %v738, %v757
            %759 = vdwg.mxu0
            %v763 = vrot.slane %v698, 7
            %v764 = vrot.slane %v758, 6
            %vm765 = vcmask 1040384
            %v766 = vsel %vm765, %v638, %v763
            %vm767 = vcmask 1041408
            %v768 = vsel %vm767, %v766, %v764
            %v770 = vadd.f32 %v427, %v768
            %v771 = vlaneseq
            %vm772 = vcmp.ge.s32.totalorder %v771, 0
            %vm773 = vcmp.lt.s32.totalorder %v771, 384
            %vm774 = vmand %vm772, %vm773
            %775 = vst.msk [vmem:[%s386] sm:$0x7] %vm774, %v770
          $region64: #{tpu_custom_call.1} parent=55 // pred_fallthru
            _
          // Predicated region
          $region65: #{tpu_custom_call.1} parent=55 // pred_check
            %p776 = pneg %p414
          $region66: #{tpu_custom_call.1} parent=55 // pred_check_branch
            %778 = sbr.rel (%p776) target = $region68
          $region67: #{tpu_custom_call.1} parent=55 // pred_region
            %v779 = vlaneseq
            %v780 = vshrl.u32 %v779, 7
            %v781 = vadd.s32 %v780, 8
            %v782 = vadd.s32 %v780, 16
            %v783 = vadd.s32 %v780, 24
            %v784 = vadd.s32 %v780, 32
            %v785 = vadd.s32 %v780, 40
            %v786 = vadd.s32 %v780, 48
            %v787 = vadd.s32 %v780, 56
            %v788 = vadd.s32 %v780, 64
            %v789 = vadd.s32 %v780, 72
            %v790 = vadd.s32 %v780, 80
            %v791 = vadd.s32 %v780, 88
            %v792 = vadd.s32 %v780, 96
            %v793 = vadd.s32 %v780, 104
            %v794 = vadd.s32 %v780, 112
            %v795 = vadd.s32 %v780, 120
            %v796 = vadd.s32 %v780, 128
            %v797 = vadd.s32 %v780, 136
            %v798 = vadd.s32 %v780, 144
            %v799 = vadd.s32 %v780, 152
            %v800 = vadd.s32 %v780, 160
            %v801 = vadd.s32 %v780, 168
            %v802 = vadd.s32 %v780, 176
            %v803 = vadd.s32 %v780, 184
            %v804 = vadd.s32 %v780, 192
            %v805 = vadd.s32 %v780, 200
            %v806 = vadd.s32 %v780, 208
            %v807 = vadd.s32 %v780, 216
            %v808 = vadd.s32 %v780, 224
            %v809 = vadd.s32 %v780, 232
            %v810 = vadd.s32 %v780, 240
            %v811 = vadd.s32 %v780, 248
            %v812 = vadd.s32 %v780, 256
            %v813 = vadd.s32 %v780, 264
            %v814 = vadd.s32 %v780, 272
            %v815 = vadd.s32 %v780, 280
            %v816 = vadd.s32 %v780, 288
            %v817 = vadd.s32 %v780, 296
            %v818 = vadd.s32 %v780, 304
            %v819 = vadd.s32 %v780, 312
            %v820 = vadd.s32 %v780, 320
            %v821 = vadd.s32 %v780, 328
            %v822 = vadd.s32 %v780, 336
            %v823 = vadd.s32 %v780, 344
            %v824 = vadd.s32 %v780, 352
            %v825 = vadd.s32 %v780, 360
            %v826 = vadd.s32 %v780, 368
            %v827 = vadd.s32 %v780, 376
            %v828 = vlaneseq
            %v829 = vand.u32 %v828, 127
            %v830 = vadd.s32 %v829, 128
            %v831 = vadd.s32 %v829, 256
            %vm832 = vcmp.lt.s32.totalorder %v780, 300
            %vm833 = vcmp.lt.s32.totalorder %v781, 300
            %vm834 = vcmp.lt.s32.totalorder %v782, 300
            %vm835 = vcmp.lt.s32.totalorder %v783, 300
            %vm836 = vcmp.lt.s32.totalorder %v784, 300
            %vm837 = vcmp.lt.s32.totalorder %v785, 300
            %vm838 = vcmp.lt.s32.totalorder %v786, 300
            %vm839 = vcmp.lt.s32.totalorder %v787, 300
            %vm840 = vcmp.lt.s32.totalorder %v788, 300
            %vm841 = vcmp.lt.s32.totalorder %v789, 300
            %vm842 = vcmp.lt.s32.totalorder %v790, 300
            %vm843 = vcmp.lt.s32.totalorder %v791, 300
            %vm844 = vcmp.lt.s32.totalorder %v792, 300
            %vm845 = vcmp.lt.s32.totalorder %v793, 300
            %vm846 = vcmp.lt.s32.totalorder %v794, 300
            %vm847 = vcmp.lt.s32.totalorder %v795, 300
            %vm848 = vcmp.lt.s32.totalorder %v796, 300
            %vm849 = vcmp.lt.s32.totalorder %v797, 300
            %vm850 = vcmp.lt.s32.totalorder %v798, 300
            %vm851 = vcmp.lt.s32.totalorder %v799, 300
            %vm852 = vcmp.lt.s32.totalorder %v800, 300
            %vm853 = vcmp.lt.s32.totalorder %v801, 300
            %vm854 = vcmp.lt.s32.totalorder %v802, 300
            %vm855 = vcmp.lt.s32.totalorder %v803, 300
            %vm856 = vcmp.lt.s32.totalorder %v804, 300
            %vm857 = vcmp.lt.s32.totalorder %v805, 300
            %vm858 = vcmp.lt.s32.totalorder %v806, 300
            %vm859 = vcmp.lt.s32.totalorder %v807, 300
            %vm860 = vcmp.lt.s32.totalorder %v808, 300
            %vm861 = vcmp.lt.s32.totalorder %v809, 300
            %vm862 = vcmp.lt.s32.totalorder %v810, 300
            %vm863 = vcmp.lt.s32.totalorder %v811, 300
            %vm864 = vcmp.lt.s32.totalorder %v812, 300
            %vm865 = vcmp.lt.s32.totalorder %v813, 300
            %vm866 = vcmp.lt.s32.totalorder %v814, 300
            %vm867 = vcmp.lt.s32.totalorder %v815, 300
            %vm868 = vcmp.lt.s32.totalorder %v816, 300
            %vm869 = vcmp.lt.s32.totalorder %v817, 300
            %vm870 = vcmp.lt.s32.totalorder %v818, 300
            %vm871 = vcmp.lt.s32.totalorder %v819, 300
            %vm872 = vcmp.lt.s32.totalorder %v820, 300
            %vm873 = vcmp.lt.s32.totalorder %v821, 300
            %vm874 = vcmp.lt.s32.totalorder %v822, 300
            %vm875 = vcmp.lt.s32.totalorder %v823, 300
            %vm876 = vcmp.lt.s32.totalorder %v824, 300
            %vm877 = vcmp.lt.s32.totalorder %v825, 300
            %vm878 = vcmp.lt.s32.totalorder %v826, 300
            %vm879 = vcmp.lt.s32.totalorder %v827, 300
            %v880 = vld [vmem:[%s326] sm:$0xff]
            %v881 = vld [vmem:[%s326 + $0x8] sm:$0xff]
            %v882 = vld [vmem:[%s326 + $0x10] sm:$0xff]
            %v883 = vld [vmem:[%s326 + $0x18] sm:$0xff]
            %v884 = vld [vmem:[%s326 + $0x20] sm:$0xff]
            %v885 = vld [vmem:[%s326 + $0x28] sm:$0xff]
            %v886 = vld [vmem:[%s326 + $0x30] sm:$0xff]
            %v887 = vld [vmem:[%s326 + $0x38] sm:$0xff]
            %v888 = vld [vmem:[%s326 + $0x40] sm:$0xff]
            %v889 = vld [vmem:[%s326 + $0x48] sm:$0xff]
            %v890 = vld [vmem:[%s326 + $0x50] sm:$0xff]
            %v891 = vld [vmem:[%s326 + $0x58] sm:$0xff]
            %v892 = vld [vmem:[%s326 + $0x60] sm:$0xff]
            %v893 = vld [vmem:[%s326 + $0x68] sm:$0xff]
            %v894 = vld [vmem:[%s326 + $0x70] sm:$0xff]
            %v895 = vld [vmem:[%s326 + $0x78] sm:$0xff]
            %v896 = vld [vmem:[%s326 + $0x80] sm:$0xff]
            %v897 = vld [vmem:[%s326 + $0x88] sm:$0xff]
            %v898 = vld [vmem:[%s326 + $0x90] sm:$0xff]
            %v899 = vld [vmem:[%s326 + $0x98] sm:$0xff]
            %v900 = vld [vmem:[%s326 + $0xa0] sm:$0xff]
            %v901 = vld [vmem:[%s326 + $0xa8] sm:$0xff]
            %v902 = vld [vmem:[%s326 + $0xb0] sm:$0xff]
            %v903 = vld [vmem:[%s326 + $0xb8] sm:$0xff]
            %v904 = vld [vmem:[%s326 + $0xc0] sm:$0xff]
            %v905 = vld [vmem:[%s326 + $0xc8] sm:$0xff]
            %v906 = vld [vmem:[%s326 + $0xd0] sm:$0xff]
            %v907 = vld [vmem:[%s326 + $0xd8] sm:$0xff]
            %v908 = vld [vmem:[%s326 + $0xe0] sm:$0xff]
            %v909 = vld [vmem:[%s326 + $0xe8] sm:$0xff]
            %v910 = vld [vmem:[%s326 + $0xf0] sm:$0xff]
            %v911 = vld [vmem:[%s326 + $0xf8] sm:$0xff]
            %v912 = vld [vmem:[%s326 + $0x100] sm:$0xff]
            %v913 = vld [vmem:[%s326 + $0x108] sm:$0xff]
            %v914 = vld [vmem:[%s326 + $0x110] sm:$0xff]
            %v915 = vld [vmem:[%s326 + $0x118] sm:$0xff]
            %v916 = vld [vmem:[%s326 + $0x120] sm:$0xff]
            %v917 = vld [vmem:[%s326 + $0x128] sm:$0xff]
            %v918 = vld [vmem:[%s326 + $0x130] sm:$0xff]
            %v919 = vld [vmem:[%s326 + $0x138] sm:$0xff]
            %v920 = vld [vmem:[%s326 + $0x140] sm:$0xff]
            %v921 = vld [vmem:[%s326 + $0x148] sm:$0xff]
            %v922 = vld [vmem:[%s326 + $0x150] sm:$0xff]
            %v923 = vld [vmem:[%s326 + $0x158] sm:$0xff]
            %v924 = vld [vmem:[%s326 + $0x160] sm:$0xff]
            %v925 = vld [vmem:[%s326 + $0x168] sm:$0xff]
            %v926 = vld [vmem:[%s326 + $0x170] sm:$0xff]
            %v927 = vld [vmem:[%s326 + $0x178] sm:$0xff]
            %v928 = vld [vmem:[%s326 + $0x180] sm:$0xff]
            %v929 = vld [vmem:[%s326 + $0x188] sm:$0xff]
            %v930 = vld [vmem:[%s326 + $0x190] sm:$0xff]
            %v931 = vld [vmem:[%s326 + $0x198] sm:$0xff]
            %v932 = vld [vmem:[%s326 + $0x1a0] sm:$0xff]
            %v933 = vld [vmem:[%s326 + $0x1a8] sm:$0xff]
            %v934 = vld [vmem:[%s326 + $0x1b0] sm:$0xff]
            %v935 = vld [vmem:[%s326 + $0x1b8] sm:$0xff]
            %v936 = vld [vmem:[%s326 + $0x1c0] sm:$0xff]
            %v937 = vld [vmem:[%s326 + $0x1c8] sm:$0xff]
            %v938 = vld [vmem:[%s326 + $0x1d0] sm:$0xff]
            %v939 = vld [vmem:[%s326 + $0x1d8] sm:$0xff]
            %v940 = vld [vmem:[%s326 + $0x1e0] sm:$0xff]
            %v941 = vld [vmem:[%s326 + $0x1e8] sm:$0xff]
            %v942 = vld [vmem:[%s326 + $0x1f0] sm:$0xff]
            %v943 = vld [vmem:[%s326 + $0x1f8] sm:$0xff]
            %v944 = vld [vmem:[%s326 + $0x200] sm:$0xff]
            %v945 = vld [vmem:[%s326 + $0x208] sm:$0xff]
            %v946 = vld [vmem:[%s326 + $0x210] sm:$0xff]
            %v947 = vld [vmem:[%s326 + $0x218] sm:$0xff]
            %v948 = vld [vmem:[%s326 + $0x220] sm:$0xff]
            %v949 = vld [vmem:[%s326 + $0x228] sm:$0xff]
            %v950 = vld [vmem:[%s326 + $0x230] sm:$0xff]
            %v951 = vld [vmem:[%s326 + $0x238] sm:$0xff]
            %v952 = vld [vmem:[%s326 + $0x240] sm:$0xff]
            %v953 = vld [vmem:[%s326 + $0x248] sm:$0xff]
            %v954 = vld [vmem:[%s326 + $0x250] sm:$0xff]
            %v955 = vld [vmem:[%s326 + $0x258] sm:$0xff]
            %v956 = vld [vmem:[%s326 + $0x260] sm:$0xff]
            %v957 = vld [vmem:[%s326 + $0x268] sm:$0xff]
            %v958 = vld [vmem:[%s326 + $0x270] sm:$0xff]
            %v959 = vld [vmem:[%s326 + $0x278] sm:$0xff]
            %v960 = vld [vmem:[%s326 + $0x280] sm:$0xff]
            %v961 = vld [vmem:[%s326 + $0x288] sm:$0xff]
            %v962 = vld [vmem:[%s326 + $0x290] sm:$0xff]
            %v963 = vld [vmem:[%s326 + $0x298] sm:$0xff]
            %v964 = vld [vmem:[%s326 + $0x2a0] sm:$0xff]
            %v965 = vld [vmem:[%s326 + $0x2a8] sm:$0xff]
            %v966 = vld [vmem:[%s326 + $0x2b0] sm:$0xff]
            %v967 = vld [vmem:[%s326 + $0x2b8] sm:$0xff]
            %v968 = vld [vmem:[%s326 + $0x2c0] sm:$0xff]
            %v969 = vld [vmem:[%s326 + $0x2c8] sm:$0xff]
            %v970 = vld [vmem:[%s326 + $0x2d0] sm:$0xff]
            %v971 = vld [vmem:[%s326 + $0x2d8] sm:$0xff]
            %v972 = vld [vmem:[%s326 + $0x2e0] sm:$0xff]
            %v973 = vld [vmem:[%s326 + $0x2e8] sm:$0xff]
            %v974 = vld [vmem:[%s326 + $0x2f0] sm:$0xff]
            %v975 = vld [vmem:[%s326 + $0x2f8] sm:$0xff]
            %v976 = vld [vmem:[%s326 + $0x300] sm:$0xff]
            %v977 = vld [vmem:[%s326 + $0x308] sm:$0xff]
            %v978 = vld [vmem:[%s326 + $0x310] sm:$0xff]
            %v979 = vld [vmem:[%s326 + $0x318] sm:$0xff]
            %v980 = vld [vmem:[%s326 + $0x320] sm:$0xff]
            %v981 = vld [vmem:[%s326 + $0x328] sm:$0xff]
            %v982 = vld [vmem:[%s326 + $0x330] sm:$0xff]
            %v983 = vld [vmem:[%s326 + $0x338] sm:$0xff]
            %v984 = vld [vmem:[%s326 + $0x340] sm:$0xff]
            %v985 = vld [vmem:[%s326 + $0x348] sm:$0xff]
            %v986 = vld [vmem:[%s326 + $0x350] sm:$0xff]
            %v987 = vld [vmem:[%s326 + $0x358] sm:$0xff]
            %v988 = vld [vmem:[%s326 + $0x360] sm:$0xff]
            %v989 = vld [vmem:[%s326 + $0x368] sm:$0xff]
            %v990 = vld [vmem:[%s326 + $0x370] sm:$0xff]
            %v991 = vld [vmem:[%s326 + $0x378] sm:$0xff]
            %v992 = vld [vmem:[%s326 + $0x380] sm:$0xff]
            %v993 = vld [vmem:[%s326 + $0x388] sm:$0xff]
            %v994 = vld [vmem:[%s326 + $0x390] sm:$0xff]
            %v995 = vld [vmem:[%s326 + $0x398] sm:$0xff]
            %v996 = vld [vmem:[%s326 + $0x3a0] sm:$0xff]
            %v997 = vld [vmem:[%s326 + $0x3a8] sm:$0xff]
            %v998 = vld [vmem:[%s326 + $0x3b0] sm:$0xff]
            %v999 = vld [vmem:[%s326 + $0x3b8] sm:$0xff]
            %v1000 = vld [vmem:[%s326 + $0x3c0] sm:$0xff]
            %v1001 = vld [vmem:[%s326 + $0x3c8] sm:$0xff]
            %v1002 = vld [vmem:[%s326 + $0x3d0] sm:$0xff]
            %v1003 = vld [vmem:[%s326 + $0x3d8] sm:$0xff]
            %v1004 = vld [vmem:[%s326 + $0x3e0] sm:$0xff]
            %v1005 = vld [vmem:[%s326 + $0x3e8] sm:$0xff]
            %v1006 = vld [vmem:[%s326 + $0x3f0] sm:$0xff]
            %v1007 = vld [vmem:[%s326 + $0x3f8] sm:$0xff]
            %v1008 = vld [vmem:[%s326 + $0x400] sm:$0xff]
            %v1009 = vld [vmem:[%s326 + $0x408] sm:$0xff]
            %v1010 = vld [vmem:[%s326 + $0x410] sm:$0xff]
            %v1011 = vld [vmem:[%s326 + $0x418] sm:$0xff]
            %v1012 = vld [vmem:[%s326 + $0x420] sm:$0xff]
            %v1013 = vld [vmem:[%s326 + $0x428] sm:$0xff]
            %v1014 = vld [vmem:[%s326 + $0x430] sm:$0xff]
            %v1015 = vld [vmem:[%s326 + $0x438] sm:$0xff]
            %v1016 = vld [vmem:[%s326 + $0x440] sm:$0xff]
            %v1017 = vld [vmem:[%s326 + $0x448] sm:$0xff]
            %v1018 = vld [vmem:[%s326 + $0x450] sm:$0xff]
            %v1019 = vld [vmem:[%s326 + $0x458] sm:$0xff]
            %v1020 = vld [vmem:[%s326 + $0x460] sm:$0xff]
            %v1021 = vld [vmem:[%s326 + $0x468] sm:$0xff]
            %v1022 = vld [vmem:[%s326 + $0x470] sm:$0xff]
            %v1023 = vld [vmem:[%s326 + $0x478] sm:$0xff]
            %v1024 = vsel %vm832, 1, 0
            %v1025 = vsel %vm833, 1, 0
            %v1026 = vsel %vm834, 1, 0
            %v1027 = vsel %vm835, 1, 0
            %v1028 = vsel %vm836, 1, 0
            %v1029 = vsel %vm837, 1, 0
            %v1030 = vsel %vm838, 1, 0
            %v1031 = vsel %vm839, 1, 0
            %v1032 = vsel %vm840, 1, 0
            %v1033 = vsel %vm841, 1, 0
            %v1034 = vsel %vm842, 1, 0
            %v1035 = vsel %vm843, 1, 0
            %v1036 = vsel %vm844, 1, 0
            %v1037 = vsel %vm845, 1, 0
            %v1038 = vsel %vm846, 1, 0
            %v1039 = vsel %vm847, 1, 0
            %v1040 = vsel %vm848, 1, 0
            %v1041 = vsel %vm849, 1, 0
            %v1042 = vsel %vm850, 1, 0
            %v1043 = vsel %vm851, 1, 0
            %v1044 = vsel %vm852, 1, 0
            %v1045 = vsel %vm853, 1, 0
            %v1046 = vsel %vm854, 1, 0
            %v1047 = vsel %vm855, 1, 0
            %v1048 = vsel %vm856, 1, 0
            %v1049 = vsel %vm857, 1, 0
            %v1050 = vsel %vm858, 1, 0
            %v1051 = vsel %vm859, 1, 0
            %v1052 = vsel %vm860, 1, 0
            %v1053 = vsel %vm861, 1, 0
            %v1054 = vsel %vm862, 1, 0
            %v1055 = vsel %vm863, 1, 0
            %v1056 = vsel %vm864, 1, 0
            %v1057 = vsel %vm865, 1, 0
            %v1058 = vsel %vm866, 1, 0
            %v1059 = vsel %vm867, 1, 0
            %v1060 = vsel %vm868, 1, 0
            %v1061 = vsel %vm869, 1, 0
            %v1062 = vsel %vm870, 1, 0
            %v1063 = vsel %vm871, 1, 0
            %v1064 = vsel %vm872, 1, 0
            %v1065 = vsel %vm873, 1, 0
            %v1066 = vsel %vm874, 1, 0
            %v1067 = vsel %vm875, 1, 0
            %v1068 = vsel %vm876, 1, 0
            %v1069 = vsel %vm877, 1, 0
            %v1070 = vsel %vm878, 1, 0
            %v1071 = vsel %vm879, 1, 0
            %vm1072 = vcmp.eq.s32.totalorder %v1024, 1
            %vm1073 = vcmp.eq.s32.totalorder %v1025, 1
            %vm1074 = vcmp.eq.s32.totalorder %v1026, 1
            %vm1075 = vcmp.eq.s32.totalorder %v1027, 1
            %vm1076 = vcmp.eq.s32.totalorder %v1028, 1
            %vm1077 = vcmp.eq.s32.totalorder %v1029, 1
            %vm1078 = vcmp.eq.s32.totalorder %v1030, 1
            %vm1079 = vcmp.eq.s32.totalorder %v1031, 1
            %vm1080 = vcmp.eq.s32.totalorder %v1032, 1
            %vm1081 = vcmp.eq.s32.totalorder %v1033, 1
            %vm1082 = vcmp.eq.s32.totalorder %v1034, 1
            %vm1083 = vcmp.eq.s32.totalorder %v1035, 1
            %vm1084 = vcmp.eq.s32.totalorder %v1036, 1
            %vm1085 = vcmp.eq.s32.totalorder %v1037, 1
            %vm1086 = vcmp.eq.s32.totalorder %v1038, 1
            %vm1087 = vcmp.eq.s32.totalorder %v1039, 1
            %vm1088 = vcmp.eq.s32.totalorder %v1040, 1
            %vm1089 = vcmp.eq.s32.totalorder %v1041, 1
            %vm1090 = vcmp.eq.s32.totalorder %v1042, 1
            %vm1091 = vcmp.eq.s32.totalorder %v1043, 1
            %vm1092 = vcmp.eq.s32.totalorder %v1044, 1
            %vm1093 = vcmp.eq.s32.totalorder %v1045, 1
            %vm1094 = vcmp.eq.s32.totalorder %v1046, 1
            %vm1095 = vcmp.eq.s32.totalorder %v1047, 1
            %vm1096 = vcmp.eq.s32.totalorder %v1048, 1
            %vm1097 = vcmp.eq.s32.totalorder %v1049, 1
            %vm1098 = vcmp.eq.s32.totalorder %v1050, 1
            %vm1099 = vcmp.eq.s32.totalorder %v1051, 1
            %vm1100 = vcmp.eq.s32.totalorder %v1052, 1
            %vm1101 = vcmp.eq.s32.totalorder %v1053, 1
            %vm1102 = vcmp.eq.s32.totalorder %v1054, 1
            %vm1103 = vcmp.eq.s32.totalorder %v1055, 1
            %vm1104 = vcmp.eq.s32.totalorder %v1056, 1
            %vm1105 = vcmp.eq.s32.totalorder %v1057, 1
            %vm1106 = vcmp.eq.s32.totalorder %v1058, 1
            %vm1107 = vcmp.eq.s32.totalorder %v1059, 1
            %vm1108 = vcmp.eq.s32.totalorder %v1060, 1
            %vm1109 = vcmp.eq.s32.totalorder %v1061, 1
            %vm1110 = vcmp.eq.s32.totalorder %v1062, 1
            %vm1111 = vcmp.eq.s32.totalorder %v1063, 1
            %vm1112 = vcmp.eq.s32.totalorder %v1064, 1
            %vm1113 = vcmp.eq.s32.totalorder %v1065, 1
            %vm1114 = vcmp.eq.s32.totalorder %v1066, 1
            %vm1115 = vcmp.eq.s32.totalorder %v1067, 1
            %vm1116 = vcmp.eq.s32.totalorder %v1068, 1
            %vm1117 = vcmp.eq.s32.totalorder %v1069, 1
            %vm1118 = vcmp.eq.s32.totalorder %v1070, 1
            %vm1119 = vcmp.eq.s32.totalorder %v1071, 1
            %v1120 = vsel %vm1072, %v880, 0.0
            %v1121 = vsel %vm1072, %v881, 0.0
            %v1122 = vsel %vm1072, %v882, 0.0
            %v1123 = vsel %vm1073, %v883, 0.0
            %v1124 = vsel %vm1073, %v884, 0.0
            %v1125 = vsel %vm1073, %v885, 0.0
            %v1126 = vsel %vm1074, %v886, 0.0
            %v1127 = vsel %vm1074, %v887, 0.0
            %v1128 = vsel %vm1074, %v888, 0.0
            %v1129 = vsel %vm1075, %v889, 0.0
            %v1130 = vsel %vm1075, %v890, 0.0
            %v1131 = vsel %vm1075, %v891, 0.0
            %v1132 = vsel %vm1076, %v892, 0.0
            %v1133 = vsel %vm1076, %v893, 0.0
            %v1134 = vsel %vm1076, %v894, 0.0
            %v1135 = vsel %vm1077, %v895, 0.0
            %v1136 = vsel %vm1077, %v896, 0.0
            %v1137 = vsel %vm1077, %v897, 0.0
            %v1138 = vsel %vm1078, %v898, 0.0
            %v1139 = vsel %vm1078, %v899, 0.0
            %v1140 = vsel %vm1078, %v900, 0.0
            %v1141 = vsel %vm1079, %v901, 0.0
            %v1142 = vsel %vm1079, %v902, 0.0
            %v1143 = vsel %vm1079, %v903, 0.0
            %v1144 = vsel %vm1080, %v904, 0.0
            %v1145 = vsel %vm1080, %v905, 0.0
            %v1146 = vsel %vm1080, %v906, 0.0
            %v1147 = vsel %vm1081, %v907, 0.0
            %v1148 = vsel %vm1081, %v908, 0.0
            %v1149 = vsel %vm1081, %v909, 0.0
            %v1150 = vsel %vm1082, %v910, 0.0
            %v1151 = vsel %vm1082, %v911, 0.0
            %v1152 = vsel %vm1082, %v912, 0.0
            %v1153 = vsel %vm1083, %v913, 0.0
            %v1154 = vsel %vm1083, %v914, 0.0
            %v1155 = vsel %vm1083, %v915, 0.0
            %v1156 = vsel %vm1084, %v916, 0.0
            %v1157 = vsel %vm1084, %v917, 0.0
            %v1158 = vsel %vm1084, %v918, 0.0
            %v1159 = vsel %vm1085, %v919, 0.0
            %v1160 = vsel %vm1085, %v920, 0.0
            %v1161 = vsel %vm1085, %v921, 0.0
            %v1162 = vsel %vm1086, %v922, 0.0
            %v1163 = vsel %vm1086, %v923, 0.0
            %v1164 = vsel %vm1086, %v924, 0.0
            %v1165 = vsel %vm1087, %v925, 0.0
            %v1166 = vsel %vm1087, %v926, 0.0
            %v1167 = vsel %vm1087, %v927, 0.0
            %v1168 = vsel %vm1088, %v928, 0.0
            %v1169 = vsel %vm1088, %v929, 0.0
            %v1170 = vsel %vm1088, %v930, 0.0
            %v1171 = vsel %vm1089, %v931, 0.0
            %v1172 = vsel %vm1089, %v932, 0.0
            %v1173 = vsel %vm1089, %v933, 0.0
            %v1174 = vsel %vm1090, %v934, 0.0
            %v1175 = vsel %vm1090, %v935, 0.0
            %v1176 = vsel %vm1090, %v936, 0.0
            %v1177 = vsel %vm1091, %v937, 0.0
            %v1178 = vsel %vm1091, %v938, 0.0
            %v1179 = vsel %vm1091, %v939, 0.0
            %v1180 = vsel %vm1092, %v940, 0.0
            %v1181 = vsel %vm1092, %v941, 0.0
            %v1182 = vsel %vm1092, %v942, 0.0
            %v1183 = vsel %vm1093, %v943, 0.0
            %v1184 = vsel %vm1093, %v944, 0.0
            %v1185 = vsel %vm1093, %v945, 0.0
            %v1186 = vsel %vm1094, %v946, 0.0
            %v1187 = vsel %vm1094, %v947, 0.0
            %v1188 = vsel %vm1094, %v948, 0.0
            %v1189 = vsel %vm1095, %v949, 0.0
            %v1190 = vsel %vm1095, %v950, 0.0
            %v1191 = vsel %vm1095, %v951, 0.0
            %v1192 = vsel %vm1096, %v952, 0.0
            %v1193 = vsel %vm1096, %v953, 0.0
            %v1194 = vsel %vm1096, %v954, 0.0
            %v1195 = vsel %vm1097, %v955, 0.0
            %v1196 = vsel %vm1097, %v956, 0.0
            %v1197 = vsel %vm1097, %v957, 0.0
            %v1198 = vsel %vm1098, %v958, 0.0
            %v1199 = vsel %vm1098, %v959, 0.0
            %v1200 = vsel %vm1098, %v960, 0.0
            %v1201 = vsel %vm1099, %v961, 0.0
            %v1202 = vsel %vm1099, %v962, 0.0
            %v1203 = vsel %vm1099, %v963, 0.0
            %v1204 = vsel %vm1100, %v964, 0.0
            %v1205 = vsel %vm1100, %v965, 0.0
            %v1206 = vsel %vm1100, %v966, 0.0
            %v1207 = vsel %vm1101, %v967, 0.0
            %v1208 = vsel %vm1101, %v968, 0.0
            %v1209 = vsel %vm1101, %v969, 0.0
            %v1210 = vsel %vm1102, %v970, 0.0
            %v1211 = vsel %vm1102, %v971, 0.0
            %v1212 = vsel %vm1102, %v972, 0.0
            %v1213 = vsel %vm1103, %v973, 0.0
            %v1214 = vsel %vm1103, %v974, 0.0
            %v1215 = vsel %vm1103, %v975, 0.0
            %v1216 = vsel %vm1104, %v976, 0.0
            %v1217 = vsel %vm1104, %v977, 0.0
            %v1218 = vsel %vm1104, %v978, 0.0
            %v1219 = vsel %vm1105, %v979, 0.0
            %v1220 = vsel %vm1105, %v980, 0.0
            %v1221 = vsel %vm1105, %v981, 0.0
            %v1222 = vsel %vm1106, %v982, 0.0
            %v1223 = vsel %vm1106, %v983, 0.0
            %v1224 = vsel %vm1106, %v984, 0.0
            %v1225 = vsel %vm1107, %v985, 0.0
            %v1226 = vsel %vm1107, %v986, 0.0
            %v1227 = vsel %vm1107, %v987, 0.0
            %v1228 = vsel %vm1108, %v988, 0.0
            %v1229 = vsel %vm1108, %v989, 0.0
            %v1230 = vsel %vm1108, %v990, 0.0
            %v1231 = vsel %vm1109, %v991, 0.0
            %v1232 = vsel %vm1109, %v992, 0.0
            %v1233 = vsel %vm1109, %v993, 0.0
            %v1234 = vsel %vm1110, %v994, 0.0
            %v1235 = vsel %vm1110, %v995, 0.0
            %v1236 = vsel %vm1110, %v996, 0.0
            %v1237 = vsel %vm1111, %v997, 0.0
            %v1238 = vsel %vm1111, %v998, 0.0
            %v1239 = vsel %vm1111, %v999, 0.0
            %v1240 = vsel %vm1112, %v1000, 0.0
            %v1241 = vsel %vm1112, %v1001, 0.0
            %v1242 = vsel %vm1112, %v1002, 0.0
            %v1243 = vsel %vm1113, %v1003, 0.0
            %v1244 = vsel %vm1113, %v1004, 0.0
            %v1245 = vsel %vm1113, %v1005, 0.0
            %v1246 = vsel %vm1114, %v1006, 0.0
            %v1247 = vsel %vm1114, %v1007, 0.0
            %v1248 = vsel %vm1114, %v1008, 0.0
            %v1249 = vsel %vm1115, %v1009, 0.0
            %v1250 = vsel %vm1115, %v1010, 0.0
            %v1251 = vsel %vm1115, %v1011, 0.0
            %v1252 = vsel %vm1116, %v1012, 0.0
            %v1253 = vsel %vm1116, %v1013, 0.0
            %v1254 = vsel %vm1116, %v1014, 0.0
            %v1255 = vsel %vm1117, %v1015, 0.0
            %v1256 = vsel %vm1117, %v1016, 0.0
            %v1257 = vsel %vm1117, %v1017, 0.0
            %v1258 = vsel %vm1118, %v1018, 0.0
            %v1259 = vsel %vm1118, %v1019, 0.0
            %v1260 = vsel %vm1118, %v1020, 0.0
            %v1261 = vsel %vm1119, %v1021, 0.0
            %v1262 = vsel %vm1119, %v1022, 0.0
            %v1263 = vsel %vm1119, %v1023, 0.0
            %vm1264 = vcmp.lt.s32.totalorder %v829, 300
            %vm1265 = vcmp.lt.s32.totalorder %v830, 300
            %vm1266 = vcmp.lt.s32.totalorder %v831, 300
            %v1267 = vld [vmem:[%s346] sm:$0x7]
            %v1269 = vperm.slane %v1267, 0
            %v1270 = vperm.slane %v1267, 1
            %v1271 = vperm.slane %v1267, 2
            %v1275 = vsel %vm1264, %v1269, 0.0
            %v1276 = vsel %vm1265, %v1270, 0.0
            %v1277 = vsel %vm1266, %v1271, 0.0
            %v1278 = vld [vmem:[%s386] sm:$0x7]
            %1279 = vmatpush.msra.mxu0 %v1165
            %1280 = vmatpush.msra.mxu0 %v1162
            %1281 = vmatpush.msra.mxu0 %v1159
            %1282 = vmatpush.msra.mxu0 %v1156
            %1283 = vmatpush.msra.mxu0 %v1153
            %1284 = vmatpush.msra.mxu0 %v1150
            %1285 = vmatpush.msra.mxu0 %v1147
            %1286 = vmatpush.msra.mxu0 %v1144
            %1287 = vmatpush.msra.mxu0 %v1141
            %1288 = vmatpush.msra.mxu0 %v1138
            %1289 = vmatpush.msra.mxu0 %v1135
            %1290 = vmatpush.msra.mxu0 %v1132
            %1291 = vmatpush.msra.mxu0 %v1129
            %1292 = vmatpush.msra.mxu0 %v1126
            %1293 = vmatpush.msra.mxu0 %v1123
            %1294 = vmatpush.msra.mxu0 %v1120
            %1295 = vmatmul.f32.gmra.mxu0 %v1275
            %v1296 = vpop.f32.mrf.mxu0
            %v1297 = vadd.f32 0.0, %v1296
            %1298 = vdwg.mxu0
            %1299 = vmatpush.msra.mxu0 %v1213
            %1300 = vmatpush.msra.mxu0 %v1210
            %1301 = vmatpush.msra.mxu0 %v1207
            %1302 = vmatpush.msra.mxu0 %v1204
            %1303 = vmatpush.msra.mxu0 %v1201
            %1304 = vmatpush.msra.mxu0 %v1198
            %1305 = vmatpush.msra.mxu0 %v1195
            %1306 = vmatpush.msra.mxu0 %v1192
            %1307 = vmatpush.msra.mxu0 %v1189
            %1308 = vmatpush.msra.mxu0 %v1186
            %1309 = vmatpush.msra.mxu0 %v1183
            %1310 = vmatpush.msra.mxu0 %v1180
            %1311 = vmatpush.msra.mxu0 %v1177
            %1312 = vmatpush.msra.mxu0 %v1174
            %1313 = vmatpush.msra.mxu0 %v1171
            %1314 = vmatpush.msra.mxu0 %v1168
            %1315 = vmatmul.f32.gmra.mxu0 %v1276
            %v1316 = vpop.f32.mrf.mxu0
            %v1317 = vadd.f32 %v1297, %v1316
            %1318 = vdwg.mxu0
            %1319 = vmatpush.msra.mxu0 %v1261
            %1320 = vmatpush.msra.mxu0 %v1258
            %1321 = vmatpush.msra.mxu0 %v1255
            %1322 = vmatpush.msra.mxu0 %v1252
            %1323 = vmatpush.msra.mxu0 %v1249
            %1324 = vmatpush.msra.mxu0 %v1246
            %1325 = vmatpush.msra.mxu0 %v1243
            %1326 = vmatpush.msra.mxu0 %v1240
            %1327 = vmatpush.msra.mxu0 %v1237
            %1328 = vmatpush.msra.mxu0 %v1234
            %1329 = vmatpush.msra.mxu0 %v1231
            %1330 = vmatpush.msra.mxu0 %v1228
            %1331 = vmatpush.msra.mxu0 %v1225
            %1332 = vmatpush.msra.mxu0 %v1222
            %1333 = vmatpush.msra.mxu0 %v1219
            %1334 = vmatpush.msra.mxu0 %v1216
            %1335 = vmatmul.f32.gmra.mxu0 %v1277
            %v1336 = vpop.f32.mrf.mxu0
            %v1337 = vadd.f32 %v1317, %v1336
            %1338 = vdwg.mxu0
            %1339 = vmatpush.msra.mxu0 %v1166
            %1340 = vmatpush.msra.mxu0 %v1163
            %1341 = vmatpush.msra.mxu0 %v1160
            %1342 = vmatpush.msra.mxu0 %v1157
            %1343 = vmatpush.msra.mxu0 %v1154
            %1344 = vmatpush.msra.mxu0 %v1151
            %1345 = vmatpush.msra.mxu0 %v1148
            %1346 = vmatpush.msra.mxu0 %v1145
            %1347 = vmatpush.msra.mxu0 %v1142
            %1348 = vmatpush.msra.mxu0 %v1139
            %1349 = vmatpush.msra.mxu0 %v1136
            %1350 = vmatpush.msra.mxu0 %v1133
            %1351 = vmatpush.msra.mxu0 %v1130
            %1352 = vmatpush.msra.mxu0 %v1127
            %1353 = vmatpush.msra.mxu0 %v1124
            %1354 = vmatpush.msra.mxu0 %v1121
            %1355 = vmatmul.f32.gmra.mxu0 %v1275
            %v1356 = vpop.f32.mrf.mxu0
            %v1357 = vadd.f32 0.0, %v1356
            %1358 = vdwg.mxu0
            %1359 = vmatpush.msra.mxu0 %v1214
            %1360 = vmatpush.msra.mxu0 %v1211
            %1361 = vmatpush.msra.mxu0 %v1208
            %1362 = vmatpush.msra.mxu0 %v1205
            %1363 = vmatpush.msra.mxu0 %v1202
            %1364 = vmatpush.msra.mxu0 %v1199
            %1365 = vmatpush.msra.mxu0 %v1196
            %1366 = vmatpush.msra.mxu0 %v1193
            %1367 = vmatpush.msra.mxu0 %v1190
            %1368 = vmatpush.msra.mxu0 %v1187
            %1369 = vmatpush.msra.mxu0 %v1184
            %1370 = vmatpush.msra.mxu0 %v1181
            %1371 = vmatpush.msra.mxu0 %v1178
            %1372 = vmatpush.msra.mxu0 %v1175
            %1373 = vmatpush.msra.mxu0 %v1172
            %1374 = vmatpush.msra.mxu0 %v1169
            %1375 = vmatmul.f32.gmra.mxu0 %v1276
            %v1376 = vpop.f32.mrf.mxu0
            %v1377 = vadd.f32 %v1357, %v1376
            %1378 = vdwg.mxu0
            %1379 = vmatpush.msra.mxu0 %v1262
            %1380 = vmatpush.msra.mxu0 %v1259
            %1381 = vmatpush.msra.mxu0 %v1256
            %1382 = vmatpush.msra.mxu0 %v1253
            %1383 = vmatpush.msra.mxu0 %v1250
            %1384 = vmatpush.msra.mxu0 %v1247
            %1385 = vmatpush.msra.mxu0 %v1244
            %1386 = vmatpush.msra.mxu0 %v1241
            %1387 = vmatpush.msra.mxu0 %v1238
            %1388 = vmatpush.msra.mxu0 %v1235
            %1389 = vmatpush.msra.mxu0 %v1232
            %1390 = vmatpush.msra.mxu0 %v1229
            %1391 = vmatpush.msra.mxu0 %v1226
            %1392 = vmatpush.msra.mxu0 %v1223
            %1393 = vmatpush.msra.mxu0 %v1220
            %1394 = vmatpush.msra.mxu0 %v1217
            %1395 = vmatmul.f32.gmra.mxu0 %v1277
            %v1396 = vpop.f32.mrf.mxu0
            %v1397 = vadd.f32 %v1377, %v1396
            %1398 = vdwg.mxu0
            %1399 = vmatpush.msra.mxu0 %v1167
            %1400 = vmatpush.msra.mxu0 %v1164
            %1401 = vmatpush.msra.mxu0 %v1161
            %1402 = vmatpush.msra.mxu0 %v1158
            %1403 = vmatpush.msra.mxu0 %v1155
            %1404 = vmatpush.msra.mxu0 %v1152
            %1405 = vmatpush.msra.mxu0 %v1149
            %1406 = vmatpush.msra.mxu0 %v1146
            %1407 = vmatpush.msra.mxu0 %v1143
            %1408 = vmatpush.msra.mxu0 %v1140
            %1409 = vmatpush.msra.mxu0 %v1137
            %1410 = vmatpush.msra.mxu0 %v1134
            %1411 = vmatpush.msra.mxu0 %v1131
            %1412 = vmatpush.msra.mxu0 %v1128
            %1413 = vmatpush.msra.mxu0 %v1125
            %1414 = vmatpush.msra.mxu0 %v1122
            %1415 = vmatmul.f32.gmra.mxu0 %v1275
            %v1416 = vpop.f32.mrf.mxu0
            %v1417 = vadd.f32 0.0, %v1416
            %1418 = vdwg.mxu0
            %1419 = vmatpush.msra.mxu0 %v1215
            %1420 = vmatpush.msra.mxu0 %v1212
            %1421 = vmatpush.msra.mxu0 %v1209
            %1422 = vmatpush.msra.mxu0 %v1206
            %1423 = vmatpush.msra.mxu0 %v1203
            %1424 = vmatpush.msra.mxu0 %v1200
            %1425 = vmatpush.msra.mxu0 %v1197
            %1426 = vmatpush.msra.mxu0 %v1194
            %1427 = vmatpush.msra.mxu0 %v1191
            %1428 = vmatpush.msra.mxu0 %v1188
            %1429 = vmatpush.msra.mxu0 %v1185
            %1430 = vmatpush.msra.mxu0 %v1182
            %1431 = vmatpush.msra.mxu0 %v1179
            %1432 = vmatpush.msra.mxu0 %v1176
            %1433 = vmatpush.msra.mxu0 %v1173
            %1434 = vmatpush.msra.mxu0 %v1170
            %1435 = vmatmul.f32.gmra.mxu0 %v1276
            %v1436 = vpop.f32.mrf.mxu0
            %v1437 = vadd.f32 %v1417, %v1436
            %1438 = vdwg.mxu0
            %1439 = vmatpush.msra.mxu0 %v1263
            %1440 = vmatpush.msra.mxu0 %v1260
            %1441 = vmatpush.msra.mxu0 %v1257
            %1442 = vmatpush.msra.mxu0 %v1254
            %1443 = vmatpush.msra.mxu0 %v1251
            %1444 = vmatpush.msra.mxu0 %v1248
            %1445 = vmatpush.msra.mxu0 %v1245
            %1446 = vmatpush.msra.mxu0 %v1242
            %1447 = vmatpush.msra.mxu0 %v1239
            %1448 = vmatpush.msra.mxu0 %v1236
            %1449 = vmatpush.msra.mxu0 %v1233
            %1450 = vmatpush.msra.mxu0 %v1230
            %1451 = vmatpush.msra.mxu0 %v1227
            %1452 = vmatpush.msra.mxu0 %v1224
            %1453 = vmatpush.msra.mxu0 %v1221
            %1454 = vmatpush.msra.mxu0 %v1218
            %1455 = vmatmul.f32.gmra.mxu0 %v1277
            %v1456 = vpop.f32.mrf.mxu0
            %v1457 = vadd.f32 %v1437, %v1456
            %1458 = vdwg.mxu0
            %v1462 = vrot.slane %v1397, 7
            %v1463 = vrot.slane %v1457, 6
            %vm1464 = vcmask 1040384
            %v1465 = vsel %vm1464, %v1337, %v1462
            %vm1466 = vcmask 1041408
            %v1467 = vsel %vm1466, %v1465, %v1463
            %v1469 = vadd.f32 %v1278, %v1467
            %v1470 = vlaneseq
            %vm1471 = vcmp.ge.s32.totalorder %v1470, 0
            %vm1472 = vcmp.lt.s32.totalorder %v1470, 384
            %vm1473 = vmand %vm1471, %vm1472
            %1474 = vst.msk [vmem:[%s386] sm:$0x7] %vm1473, %v1469
          $region68: #{tpu_custom_call.1} parent=55 // pred_fallthru
            _
        $region56: #{tpu_custom_call.1} parent=35 // pred_fallthru
          _
        %p1475 = scmp.eq.s32.totalorder %s34, 1
        // Predicated region
        $region69: #{tpu_custom_call.1} parent=35 // pred_check
          %p1476 = pneg %p1475
        $region70: #{tpu_custom_call.1} parent=35 // pred_check_branch
          %1478 = sbr.rel (%p1476) target = $region72
        $region71: #{tpu_custom_call.1} parent=35 // pred_region
          %v1479 = vld [vmem:[#allocation8] sm:$0x7]
          %v1480 = vld [vmem:[%s336] sm:$0xff]
          %v1481 = vld [vmem:[%s336 + $0x8] sm:$0xff]
          %v1482 = vld [vmem:[%s336 + $0x10] sm:$0xff]
          %v1483 = vld [vmem:[%s336 + $0x18] sm:$0xff]
          %v1484 = vld [vmem:[%s336 + $0x20] sm:$0xff]
          %v1485 = vld [vmem:[%s336 + $0x28] sm:$0xff]
          %v1486 = vld [vmem:[%s336 + $0x30] sm:$0xff]
          %v1487 = vld [vmem:[%s336 + $0x38] sm:$0xff]
          %v1488 = vld [vmem:[%s336 + $0x40] sm:$0xff]
          %v1489 = vld [vmem:[%s336 + $0x48] sm:$0xff]
          %v1490 = vld [vmem:[%s336 + $0x50] sm:$0xff]
          %v1491 = vld [vmem:[%s336 + $0x58] sm:$0xff]
          %v1492 = vld [vmem:[%s336 + $0x60] sm:$0xff]
          %v1493 = vld [vmem:[%s336 + $0x68] sm:$0xff]
          %v1494 = vld [vmem:[%s336 + $0x70] sm:$0xff]
          %v1495 = vld [vmem:[%s336 + $0x78] sm:$0xff]
          %v1496 = vld [vmem:[%s336 + $0x80] sm:$0xff]
          %v1497 = vld [vmem:[%s336 + $0x88] sm:$0xff]
          %v1498 = vld [vmem:[%s336 + $0x90] sm:$0xff]
          %v1499 = vld [vmem:[%s336 + $0x98] sm:$0xff]
          %v1500 = vld [vmem:[%s336 + $0xa0] sm:$0xff]
          %v1501 = vld [vmem:[%s336 + $0xa8] sm:$0xff]
          %v1502 = vld [vmem:[%s336 + $0xb0] sm:$0xff]
          %v1503 = vld [vmem:[%s336 + $0xb8] sm:$0xff]
          %v1504 = vld [vmem:[%s336 + $0xc0] sm:$0xff]
          %v1505 = vld [vmem:[%s336 + $0xc8] sm:$0xff]
          %v1506 = vld [vmem:[%s336 + $0xd0] sm:$0xff]
          %v1507 = vld [vmem:[%s336 + $0xd8] sm:$0xff]
          %v1508 = vld [vmem:[%s336 + $0xe0] sm:$0xff]
          %v1509 = vld [vmem:[%s336 + $0xe8] sm:$0xff]
          %v1510 = vld [vmem:[%s336 + $0xf0] sm:$0xff]
          %v1511 = vld [vmem:[%s336 + $0xf8] sm:$0xff]
          %v1512 = vld [vmem:[%s336 + $0x100] sm:$0xff]
          %v1513 = vld [vmem:[%s336 + $0x108] sm:$0xff]
          %v1514 = vld [vmem:[%s336 + $0x110] sm:$0xff]
          %v1515 = vld [vmem:[%s336 + $0x118] sm:$0xff]
          %v1516 = vld [vmem:[%s336 + $0x120] sm:$0xff]
          %v1517 = vld [vmem:[%s336 + $0x128] sm:$0xff]
          %v1518 = vld [vmem:[%s336 + $0x130] sm:$0xff]
          %v1519 = vld [vmem:[%s336 + $0x138] sm:$0xff]
          %v1520 = vld [vmem:[%s336 + $0x140] sm:$0xff]
          %v1521 = vld [vmem:[%s336 + $0x148] sm:$0xff]
          %v1522 = vld [vmem:[%s336 + $0x150] sm:$0xff]
          %v1523 = vld [vmem:[%s336 + $0x158] sm:$0xff]
          %v1524 = vld [vmem:[%s336 + $0x160] sm:$0xff]
          %v1525 = vld [vmem:[%s336 + $0x168] sm:$0xff]
          %v1526 = vld [vmem:[%s336 + $0x170] sm:$0xff]
          %v1527 = vld [vmem:[%s336 + $0x178] sm:$0xff]
          %v1528 = vld [vmem:[%s336 + $0x180] sm:$0xff]
          %v1529 = vld [vmem:[%s336 + $0x188] sm:$0xff]
          %v1530 = vld [vmem:[%s336 + $0x190] sm:$0xff]
          %v1531 = vld [vmem:[%s336 + $0x198] sm:$0xff]
          %v1532 = vld [vmem:[%s336 + $0x1a0] sm:$0xff]
          %v1533 = vld [vmem:[%s336 + $0x1a8] sm:$0xff]
          %v1534 = vld [vmem:[%s336 + $0x1b0] sm:$0xff]
          %v1535 = vld [vmem:[%s336 + $0x1b8] sm:$0xff]
          %v1536 = vld [vmem:[%s336 + $0x1c0] sm:$0xff]
          %v1537 = vld [vmem:[%s336 + $0x1c8] sm:$0xff]
          %v1538 = vld [vmem:[%s336 + $0x1d0] sm:$0xff]
          %v1539 = vld [vmem:[%s336 + $0x1d8] sm:$0xff]
          %v1540 = vld [vmem:[%s336 + $0x1e0] sm:$0xff]
          %v1541 = vld [vmem:[%s336 + $0x1e8] sm:$0xff]
          %v1542 = vld [vmem:[%s336 + $0x1f0] sm:$0xff]
          %v1543 = vld [vmem:[%s336 + $0x1f8] sm:$0xff]
          %v1544 = vld [vmem:[%s336 + $0x200] sm:$0xff]
          %v1545 = vld [vmem:[%s336 + $0x208] sm:$0xff]
          %v1546 = vld [vmem:[%s336 + $0x210] sm:$0xff]
          %v1547 = vld [vmem:[%s336 + $0x218] sm:$0xff]
          %v1548 = vld [vmem:[%s336 + $0x220] sm:$0xff]
          %v1549 = vld [vmem:[%s336 + $0x228] sm:$0xff]
          %v1550 = vld [vmem:[%s336 + $0x230] sm:$0xff]
          %v1551 = vld [vmem:[%s336 + $0x238] sm:$0xff]
          %v1552 = vld [vmem:[%s336 + $0x240] sm:$0xff]
          %v1553 = vld [vmem:[%s336 + $0x248] sm:$0xff]
          %v1554 = vld [vmem:[%s336 + $0x250] sm:$0xff]
          %v1555 = vld [vmem:[%s336 + $0x258] sm:$0xff]
          %v1556 = vld [vmem:[%s336 + $0x260] sm:$0xff]
          %v1557 = vld [vmem:[%s336 + $0x268] sm:$0xff]
          %v1558 = vld [vmem:[%s336 + $0x270] sm:$0xff]
          %v1559 = vld [vmem:[%s336 + $0x278] sm:$0xff]
          %v1560 = vld [vmem:[%s336 + $0x280] sm:$0xff]
          %v1561 = vld [vmem:[%s336 + $0x288] sm:$0xff]
          %v1562 = vld [vmem:[%s336 + $0x290] sm:$0xff]
          %v1563 = vld [vmem:[%s336 + $0x298] sm:$0xff]
          %v1564 = vld [vmem:[%s336 + $0x2a0] sm:$0xff]
          %v1565 = vld [vmem:[%s336 + $0x2a8] sm:$0xff]
          %v1566 = vld [vmem:[%s336 + $0x2b0] sm:$0xff]
          %v1567 = vld [vmem:[%s336 + $0x2b8] sm:$0xff]
          %v1568 = vld [vmem:[%s336 + $0x2c0] sm:$0xff]
          %v1569 = vld [vmem:[%s336 + $0x2c8] sm:$0xff]
          %v1570 = vld [vmem:[%s336 + $0x2d0] sm:$0xff]
          %v1571 = vld [vmem:[%s336 + $0x2d8] sm:$0xff]
          %v1572 = vld [vmem:[%s336 + $0x2e0] sm:$0xff]
          %v1573 = vld [vmem:[%s336 + $0x2e8] sm:$0xff]
          %v1574 = vld [vmem:[%s336 + $0x2f0] sm:$0xff]
          %v1575 = vld [vmem:[%s336 + $0x2f8] sm:$0xff]
          %v1576 = vld [vmem:[%s336 + $0x300] sm:$0xff]
          %v1577 = vld [vmem:[%s336 + $0x308] sm:$0xff]
          %v1578 = vld [vmem:[%s336 + $0x310] sm:$0xff]
          %v1579 = vld [vmem:[%s336 + $0x318] sm:$0xff]
          %v1580 = vld [vmem:[%s336 + $0x320] sm:$0xff]
          %v1581 = vld [vmem:[%s336 + $0x328] sm:$0xff]
          %v1582 = vld [vmem:[%s336 + $0x330] sm:$0xff]
          %v1583 = vld [vmem:[%s336 + $0x338] sm:$0xff]
          %v1584 = vld [vmem:[%s336 + $0x340] sm:$0xff]
          %v1585 = vld [vmem:[%s336 + $0x348] sm:$0xff]
          %v1586 = vld [vmem:[%s336 + $0x350] sm:$0xff]
          %v1587 = vld [vmem:[%s336 + $0x358] sm:$0xff]
          %v1588 = vld [vmem:[%s336 + $0x360] sm:$0xff]
          %v1589 = vld [vmem:[%s336 + $0x368] sm:$0xff]
          %v1590 = vld [vmem:[%s336 + $0x370] sm:$0xff]
          %v1591 = vld [vmem:[%s336 + $0x378] sm:$0xff]
          %v1592 = vld [vmem:[%s336 + $0x380] sm:$0xff]
          %v1593 = vld [vmem:[%s336 + $0x388] sm:$0xff]
          %v1594 = vld [vmem:[%s336 + $0x390] sm:$0xff]
          %v1595 = vld [vmem:[%s336 + $0x398] sm:$0xff]
          %v1596 = vld [vmem:[%s336 + $0x3a0] sm:$0xff]
          %v1597 = vld [vmem:[%s336 + $0x3a8] sm:$0xff]
          %v1598 = vld [vmem:[%s336 + $0x3b0] sm:$0xff]
          %v1599 = vld [vmem:[%s336 + $0x3b8] sm:$0xff]
          %v1600 = vld [vmem:[%s336 + $0x3c0] sm:$0xff]
          %v1601 = vld [vmem:[%s336 + $0x3c8] sm:$0xff]
          %v1602 = vld [vmem:[%s336 + $0x3d0] sm:$0xff]
          %v1603 = vld [vmem:[%s336 + $0x3d8] sm:$0xff]
          %v1604 = vld [vmem:[%s336 + $0x3e0] sm:$0xff]
          %v1605 = vld [vmem:[%s336 + $0x3e8] sm:$0xff]
          %v1606 = vld [vmem:[%s336 + $0x3f0] sm:$0xff]
          %v1607 = vld [vmem:[%s336 + $0x3f8] sm:$0xff]
          %v1608 = vld [vmem:[%s336 + $0x400] sm:$0xff]
          %v1609 = vld [vmem:[%s336 + $0x408] sm:$0xff]
          %v1610 = vld [vmem:[%s336 + $0x410] sm:$0xff]
          %v1611 = vld [vmem:[%s336 + $0x418] sm:$0xff]
          %v1612 = vld [vmem:[%s336 + $0x420] sm:$0xff]
          %v1613 = vld [vmem:[%s336 + $0x428] sm:$0xff]
          %v1614 = vld [vmem:[%s336 + $0x430] sm:$0xff]
          %v1615 = vld [vmem:[%s336 + $0x438] sm:$0xff]
          %v1616 = vld [vmem:[%s336 + $0x440] sm:$0xff]
          %v1617 = vld [vmem:[%s336 + $0x448] sm:$0xff]
          %v1618 = vld [vmem:[%s336 + $0x450] sm:$0xff]
          %v1619 = vld [vmem:[%s336 + $0x458] sm:$0xff]
          %v1620 = vld [vmem:[%s336 + $0x460] sm:$0xff]
          %v1621 = vld [vmem:[%s336 + $0x468] sm:$0xff]
          %v1622 = vld [vmem:[%s336 + $0x470] sm:$0xff]
          %v1623 = vld [vmem:[%s336 + $0x478] sm:$0xff]
          %v1625 = vperm.slane %v1479, 0
          %v1626 = vperm.slane %v1479, 1
          %v1627 = vperm.slane %v1479, 2
          %1631 = vmatpush.xpose.msra.mxu0 %v1525
          %1632 = vmatpush.xpose.msra.mxu0 %v1522
          %1633 = vmatpush.xpose.msra.mxu0 %v1519
          %1634 = vmatpush.xpose.msra.mxu0 %v1516
          %1635 = vmatpush.xpose.msra.mxu0 %v1513
          %1636 = vmatpush.xpose.msra.mxu0 %v1510
          %1637 = vmatpush.xpose.msra.mxu0 %v1507
          %1638 = vmatpush.xpose.msra.mxu0 %v1504
          %1639 = vmatpush.xpose.msra.mxu0 %v1501
          %1640 = vmatpush.xpose.msra.mxu0 %v1498
          %1641 = vmatpush.xpose.msra.mxu0 %v1495
          %1642 = vmatpush.xpose.msra.mxu0 %v1492
          %1643 = vmatpush.xpose.msra.mxu0 %v1489
          %1644 = vmatpush.xpose.msra.mxu0 %v1486
          %1645 = vmatpush.xpose.msra.mxu0 %v1483
          %1646 = vmatpush.xpose.msra.mxu0 %v1480
          %1647 = vmatmul.f32.gmra.mxu0 %v1625
          %v1648 = vpop.f32.mrf.mxu0
          %v1649 = vadd.f32 0.0, %v1648
          %1650 = vdwg.mxu0
          %1651 = vmatpush.xpose.msra.mxu0 %v1526
          %1652 = vmatpush.xpose.msra.mxu0 %v1523
          %1653 = vmatpush.xpose.msra.mxu0 %v1520
          %1654 = vmatpush.xpose.msra.mxu0 %v1517
          %1655 = vmatpush.xpose.msra.mxu0 %v1514
          %1656 = vmatpush.xpose.msra.mxu0 %v1511
          %1657 = vmatpush.xpose.msra.mxu0 %v1508
          %1658 = vmatpush.xpose.msra.mxu0 %v1505
          %1659 = vmatpush.xpose.msra.mxu0 %v1502
          %1660 = vmatpush.xpose.msra.mxu0 %v1499
          %1661 = vmatpush.xpose.msra.mxu0 %v1496
          %1662 = vmatpush.xpose.msra.mxu0 %v1493
          %1663 = vmatpush.xpose.msra.mxu0 %v1490
          %1664 = vmatpush.xpose.msra.mxu0 %v1487
          %1665 = vmatpush.xpose.msra.mxu0 %v1484
          %1666 = vmatpush.xpose.msra.mxu0 %v1481
          %1667 = vmatmul.f32.gmra.mxu0 %v1626
          %v1668 = vpop.f32.mrf.mxu0
          %v1669 = vadd.f32 %v1649, %v1668
          %1670 = vdwg.mxu0
          %1671 = vmatpush.xpose.msra.mxu0 %v1527
          %1672 = vmatpush.xpose.msra.mxu0 %v1524
          %1673 = vmatpush.xpose.msra.mxu0 %v1521
          %1674 = vmatpush.xpose.msra.mxu0 %v1518
          %1675 = vmatpush.xpose.msra.mxu0 %v1515
          %1676 = vmatpush.xpose.msra.mxu0 %v1512
          %1677 = vmatpush.xpose.msra.mxu0 %v1509
          %1678 = vmatpush.xpose.msra.mxu0 %v1506
          %1679 = vmatpush.xpose.msra.mxu0 %v1503
          %1680 = vmatpush.xpose.msra.mxu0 %v1500
          %1681 = vmatpush.xpose.msra.mxu0 %v1497
          %1682 = vmatpush.xpose.msra.mxu0 %v1494
          %1683 = vmatpush.xpose.msra.mxu0 %v1491
          %1684 = vmatpush.xpose.msra.mxu0 %v1488
          %1685 = vmatpush.xpose.msra.mxu0 %v1485
          %1686 = vmatpush.xpose.msra.mxu0 %v1482
          %1687 = vmatmul.f32.gmra.mxu0 %v1627
          %v1688 = vpop.f32.mrf.mxu0
          %v1689 = vadd.f32 %v1669, %v1688
          %1690 = vdwg.mxu0
          %1691 = vmatpush.xpose.msra.mxu0 %v1573
          %1692 = vmatpush.xpose.msra.mxu0 %v1570
          %1693 = vmatpush.xpose.msra.mxu0 %v1567
          %1694 = vmatpush.xpose.msra.mxu0 %v1564
          %1695 = vmatpush.xpose.msra.mxu0 %v1561
          %1696 = vmatpush.xpose.msra.mxu0 %v1558
          %1697 = vmatpush.xpose.msra.mxu0 %v1555
          %1698 = vmatpush.xpose.msra.mxu0 %v1552
          %1699 = vmatpush.xpose.msra.mxu0 %v1549
          %1700 = vmatpush.xpose.msra.mxu0 %v1546
          %1701 = vmatpush.xpose.msra.mxu0 %v1543
          %1702 = vmatpush.xpose.msra.mxu0 %v1540
          %1703 = vmatpush.xpose.msra.mxu0 %v1537
          %1704 = vmatpush.xpose.msra.mxu0 %v1534
          %1705 = vmatpush.xpose.msra.mxu0 %v1531
          %1706 = vmatpush.xpose.msra.mxu0 %v1528
          %1707 = vmatmul.f32.gmra.mxu0 %v1625
          %v1708 = vpop.f32.mrf.mxu0
          %v1709 = vadd.f32 0.0, %v1708
          %1710 = vdwg.mxu0
          %1711 = vmatpush.xpose.msra.mxu0 %v1574
          %1712 = vmatpush.xpose.msra.mxu0 %v1571
          %1713 = vmatpush.xpose.msra.mxu0 %v1568
          %1714 = vmatpush.xpose.msra.mxu0 %v1565
          %1715 = vmatpush.xpose.msra.mxu0 %v1562
          %1716 = vmatpush.xpose.msra.mxu0 %v1559
          %1717 = vmatpush.xpose.msra.mxu0 %v1556
          %1718 = vmatpush.xpose.msra.mxu0 %v1553
          %1719 = vmatpush.xpose.msra.mxu0 %v1550
          %1720 = vmatpush.xpose.msra.mxu0 %v1547
          %1721 = vmatpush.xpose.msra.mxu0 %v1544
          %1722 = vmatpush.xpose.msra.mxu0 %v1541
          %1723 = vmatpush.xpose.msra.mxu0 %v1538
          %1724 = vmatpush.xpose.msra.mxu0 %v1535
          %1725 = vmatpush.xpose.msra.mxu0 %v1532
          %1726 = vmatpush.xpose.msra.mxu0 %v1529
          %1727 = vmatmul.f32.gmra.mxu0 %v1626
          %v1728 = vpop.f32.mrf.mxu0
          %v1729 = vadd.f32 %v1709, %v1728
          %1730 = vdwg.mxu0
          %1731 = vmatpush.xpose.msra.mxu0 %v1575
          %1732 = vmatpush.xpose.msra.mxu0 %v1572
          %1733 = vmatpush.xpose.msra.mxu0 %v1569
          %1734 = vmatpush.xpose.msra.mxu0 %v1566
          %1735 = vmatpush.xpose.msra.mxu0 %v1563
          %1736 = vmatpush.xpose.msra.mxu0 %v1560
          %1737 = vmatpush.xpose.msra.mxu0 %v1557
          %1738 = vmatpush.xpose.msra.mxu0 %v1554
          %1739 = vmatpush.xpose.msra.mxu0 %v1551
          %1740 = vmatpush.xpose.msra.mxu0 %v1548
          %1741 = vmatpush.xpose.msra.mxu0 %v1545
          %1742 = vmatpush.xpose.msra.mxu0 %v1542
          %1743 = vmatpush.xpose.msra.mxu0 %v1539
          %1744 = vmatpush.xpose.msra.mxu0 %v1536
          %1745 = vmatpush.xpose.msra.mxu0 %v1533
          %1746 = vmatpush.xpose.msra.mxu0 %v1530
          %1747 = vmatmul.f32.gmra.mxu0 %v1627
          %v1748 = vpop.f32.mrf.mxu0
          %v1749 = vadd.f32 %v1729, %v1748
          %1750 = vdwg.mxu0
          %1751 = vmatpush.xpose.msra.mxu0 %v1621
          %1752 = vmatpush.xpose.msra.mxu0 %v1618
          %1753 = vmatpush.xpose.msra.mxu0 %v1615
          %1754 = vmatpush.xpose.msra.mxu0 %v1612
          %1755 = vmatpush.xpose.msra.mxu0 %v1609
          %1756 = vmatpush.xpose.msra.mxu0 %v1606
          %1757 = vmatpush.xpose.msra.mxu0 %v1603
          %1758 = vmatpush.xpose.msra.mxu0 %v1600
          %1759 = vmatpush.xpose.msra.mxu0 %v1597
          %1760 = vmatpush.xpose.msra.mxu0 %v1594
          %1761 = vmatpush.xpose.msra.mxu0 %v1591
          %1762 = vmatpush.xpose.msra.mxu0 %v1588
          %1763 = vmatpush.xpose.msra.mxu0 %v1585
          %1764 = vmatpush.xpose.msra.mxu0 %v1582
          %1765 = vmatpush.xpose.msra.mxu0 %v1579
          %1766 = vmatpush.xpose.msra.mxu0 %v1576
          %1767 = vmatmul.f32.gmra.mxu0 %v1625
          %v1768 = vpop.f32.mrf.mxu0
          %v1769 = vadd.f32 0.0, %v1768
          %1770 = vdwg.mxu0
          %1771 = vmatpush.xpose.msra.mxu0 %v1622
          %1772 = vmatpush.xpose.msra.mxu0 %v1619
          %1773 = vmatpush.xpose.msra.mxu0 %v1616
          %1774 = vmatpush.xpose.msra.mxu0 %v1613
          %1775 = vmatpush.xpose.msra.mxu0 %v1610
          %1776 = vmatpush.xpose.msra.mxu0 %v1607
          %1777 = vmatpush.xpose.msra.mxu0 %v1604
          %1778 = vmatpush.xpose.msra.mxu0 %v1601
          %1779 = vmatpush.xpose.msra.mxu0 %v1598
          %1780 = vmatpush.xpose.msra.mxu0 %v1595
          %1781 = vmatpush.xpose.msra.mxu0 %v1592
          %1782 = vmatpush.xpose.msra.mxu0 %v1589
          %1783 = vmatpush.xpose.msra.mxu0 %v1586
          %1784 = vmatpush.xpose.msra.mxu0 %v1583
          %1785 = vmatpush.xpose.msra.mxu0 %v1580
          %1786 = vmatpush.xpose.msra.mxu0 %v1577
          %1787 = vmatmul.f32.gmra.mxu0 %v1626
          %v1788 = vpop.f32.mrf.mxu0
          %v1789 = vadd.f32 %v1769, %v1788
          %1790 = vdwg.mxu0
          %1791 = vmatpush.xpose.msra.mxu0 %v1623
          %1792 = vmatpush.xpose.msra.mxu0 %v1620
          %1793 = vmatpush.xpose.msra.mxu0 %v1617
          %1794 = vmatpush.xpose.msra.mxu0 %v1614
          %1795 = vmatpush.xpose.msra.mxu0 %v1611
          %1796 = vmatpush.xpose.msra.mxu0 %v1608
          %1797 = vmatpush.xpose.msra.mxu0 %v1605
          %1798 = vmatpush.xpose.msra.mxu0 %v1602
          %1799 = vmatpush.xpose.msra.mxu0 %v1599
          %1800 = vmatpush.xpose.msra.mxu0 %v1596
          %1801 = vmatpush.xpose.msra.mxu0 %v1593
          %1802 = vmatpush.xpose.msra.mxu0 %v1590
          %1803 = vmatpush.xpose.msra.mxu0 %v1587
          %1804 = vmatpush.xpose.msra.mxu0 %v1584
          %1805 = vmatpush.xpose.msra.mxu0 %v1581
          %1806 = vmatpush.xpose.msra.mxu0 %v1578
          %1807 = vmatmul.f32.gmra.mxu0 %v1627
          %v1808 = vpop.f32.mrf.mxu0
          %v1809 = vadd.f32 %v1789, %v1808
          %1810 = vdwg.mxu0
          %v1814 = vrot.slane %v1749, 7
          %v1815 = vrot.slane %v1809, 6
          %vm1816 = vcmask 1040384
          %v1817 = vsel %vm1816, %v1689, %v1814
          %vm1818 = vcmask 1041408
          %v1819 = vsel %vm1818, %v1817, %v1815
          %v1821 = vlaneseq
          %vm1822 = vcmp.ge.s32.totalorder %v1821, 0
          %vm1823 = vcmp.lt.s32.totalorder %v1821, 384
          %vm1824 = vmand %vm1822, %vm1823
          %1825 = vst.msk [vmem:[%s393] sm:$0x7] %vm1824, %v1819
        $region72: #{tpu_custom_call.1} parent=35 // pred_fallthru
          _
        %s1826 = sand.u32 %s159, 1
        %s1827 = scalar_lea.sflag [#allocation4], %s1826
        %s1828 = sand.u32 %s159, 1
        %s1829 = smul.addr %s1828, 3
        %s1830 = scalar_lea.vmem [#allocation10], %s1829
        %s1831 = sand.u32 %s189, 1
        %s1832 = scalar_lea.sflag [#allocation12], %s1831
        %s1833 = sand.u32 %s189, 1
        %s1834 = smul.addr %s1833, 3
        %s1835 = scalar_lea.vmem [#allocation11], %s1834
        // Predicated region
        $region73: #{tpu_custom_call.1} parent=35 // pred_check
          %p1836 = pneg %p169
        $region74: #{tpu_custom_call.1} parent=35 // pred_check_branch
          %1838 = sbr.rel (%p1836) target = $region76
        $region75: #{tpu_custom_call.1} parent=35 // pred_region
          %1840 = vsyncadd %s1827, 0
          %s1841 = smul.addr %s34, 3
          %s1842 = scalar_lea.hbm %s4, %s1841
          %s1844 = sshll.u32 %s1830, 4
          %s1845 = int_to_ptr.vmem [resolvable:$true] %s1844
          %s1846 = sshll.u32 %s1842, 4
          %s1847 = int_to_ptr.hbm [resolvable:$true] %s1846
          %1849 = dma.vmem_to_hbm [thread:$0]  %s1845, 48, %s1847, %s1827
        $region76: #{tpu_custom_call.1} parent=35 // pred_fallthru
          _
        // Predicated region
        $region77: #{tpu_custom_call.1} parent=35 // pred_check
          %p1850 = pneg %p199
        $region78: #{tpu_custom_call.1} parent=35 // pred_check_branch
          %1852 = sbr.rel (%p1850) target = $region80
        $region79: #{tpu_custom_call.1} parent=35 // pred_region
          %s1853 = smul.u32 %s35, %s34
          %s1854 = smul.u32 3, %s1853
          %1856 = vsyncadd %s1832, 0
          %s1857 = smul.addr %s34, 3
          %s1858 = sadd.s32 %s1854, %s1857
          %s1859 = scalar_lea.hbm %s5, %s1858
          %s1861 = sshll.u32 %s1835, 4
          %s1862 = int_to_ptr.vmem [resolvable:$true] %s1861
          %s1863 = sshll.u32 %s1859, 4
          %s1864 = int_to_ptr.hbm [resolvable:$true] %s1863
          %1866 = dma.vmem_to_hbm [thread:$0]  %s1862, 48, %s1864, %s1832
        $region80: #{tpu_custom_call.1} parent=35 // pred_fallthru
          _
      $region36: #{tpu_custom_call.1} parent=5 // pred_fallthru
        _
      %p1867 = scmp.le.s32.totalorder 2, %s25
      // Predicated region
      $region81: #{tpu_custom_call.1} parent=5 // pred_check
        %p1868 = pneg %p1867
      $region82: #{tpu_custom_call.1} parent=5 // pred_check_branch
        %1870 = sbr.rel (%p1868) target = $region84
      $region83: #{tpu_custom_call.1} parent=5 // pred_region
        %s1871 = ssub.s32 %s25, 2
        // Predicated region
        $region85: #{tpu_custom_call.1} parent=83 // pred_check
          %p1872 = pneg %p175
        $region86: #{tpu_custom_call.1} parent=83 // pred_check_branch
          %1874 = sbr.rel (%p1872) target = $region88
        $region87: #{tpu_custom_call.1} parent=83 // pred_region
          %s1875 = sand.u32 %s160, 1
          %s1876 = scalar_lea.sflag [#allocation4], %s1875
          %s1877 = sand.u32 %s160, 1
          %s1878 = smul.addr %s1877, 3
          %s1879 = scalar_lea.vmem [#allocation10], %s1878
          %1881 = dma.done %s1876, 48
        $region88: #{tpu_custom_call.1} parent=83 // pred_fallthru
          _
        // Predicated region
        $region89: #{tpu_custom_call.1} parent=83 // pred_check
          %p1882 = pneg %p205
        $region90: #{tpu_custom_call.1} parent=83 // pred_check_branch
          %1884 = sbr.rel (%p1882) target = $region92
        $region91: #{tpu_custom_call.1} parent=83 // pred_region
          %s1885 = sand.u32 %s190, 1
          %s1886 = scalar_lea.sflag [#allocation12], %s1885
          %s1887 = sand.u32 %s190, 1
          %s1888 = smul.addr %s1887, 3
          %s1889 = scalar_lea.vmem [#allocation11], %s1888
          %1891 = dma.done %s1886, 48
        $region92: #{tpu_custom_call.1} parent=83 // pred_fallthru
          _
      $region84: #{tpu_custom_call.1} parent=5 // pred_fallthru
        _
    $region6: #{tpu_custom_call.1} parent=1 // loop_footer
      %s29 = sadd.s32 1, %s25
    $region7: #{tpu_custom_call.1} parent=1 // loop_footer_branch
      %24 = sbr.rel target = $region3
    $region8: #{tpu_custom_call.1} parent=1 // loop_exit
      _
    %1892 = vsyncpa [#allocation3], 1
    %s1893 = scalar_lea.sflag [#allocation3], 1
    %1894 = vsyncpa %s1893, 1
    %1895 = vsyncpa [#allocation6], 1
    %s1896 = scalar_lea.sflag [#allocation6], 1
    %1897 = vsyncpa %s1896, 1
    %1898 = vsyncpa [#allocation9], 1
    %1899 = vsyncpa [#allocation4], 1
    %s1900 = scalar_lea.sflag [#allocation4], 1
    %1901 = vsyncpa %s1900, 1
    %1902 = vsyncpa [#allocation12], 1
    %s1903 = scalar_lea.sflag [#allocation12], 1
    %1904 = vsyncpa %s1903, 1

</llo_original>
